<compile_context>
chip_gen: v5e
topology: v5e:2x2
jax: 0.10.0
libtpu: 0.0.40
codegen_flags: <defaults>
</compile_context>

<pallas_src>
import functools

import jax
import jax.numpy as jnp
from jax.experimental import pallas as pl
from jax.experimental.pallas import tpu as pltpu

DIM = 32          # embedding dim
NUM_HEADS = 8     # -> head_dim = 4
MLP_RATIO = 4.0   # -> mlp hidden = 128
LN_EPS = 1e-5     # torch.nn.LayerNorm default eps
NEG_INF = -1e30


def _layernorm(v, w, b):
    mu = jnp.mean(v, axis=-1, keepdims=True)
    d = v - mu
    var = jnp.mean(d * d, axis=-1, keepdims=True)
    return d * jax.lax.rsqrt(var + LN_EPS) * w + b


def _gelu_exact(x):
    # matches torch.nn.GELU() (erf-based, non-approximate)
    return 0.5 * x * (1.0 + jax.lax.erf(x * (1.0 / jnp.sqrt(2.0).astype(x.dtype))))


def block_kernel(x_ref, bias_ref, n1w_ref, n1b_ref, qkv_w_ref, proj_w_ref,
                 proj_b_ref, n2w_ref, n2b_ref, fc1_w_ref, fc1_b_ref,
                 fc2_w_ref, fc2_b_ref, o_ref, *, num_heads, seq_len):
    # One grid step == G whole batch elements, flattened to (G*N, C) rows.
    x = x_ref[...].astype(jnp.float32)            # (R, C), R = G*N
    R, C = x.shape
    N = seq_len
    G = R // N
    hd = C // num_heads
    hn = num_heads * N

    # ---------------- self-attention on norm1(x) ----------------
    h = _layernorm(x, n1w_ref[...], n1b_ref[...])
    # qk scale is pre-folded into the q columns of qkv_w (wrapper).
    qkv = jnp.dot(h, qkv_w_ref[...], preferred_element_type=jnp.float32)   # (R, 3C)
    q = qkv[:, 0:C]
    k = qkv[:, C:2 * C]
    v = qkv[:, 2 * C:3 * C]

    bias = bias_ref[...]                          # (H*N, H*N) block-diag mask (0 / -1e30)

    # TODO(synk): mask=None / eval path only; the optional additive attention
    # mask, cross-attention branch, dropout/drop-path training behavior and
    # visualize/attention-map hooks are not wired into the kernel.
    per_batch = []
    for b in range(G):                            # static unroll over batch elems in tile
        r0 = b * N
        qb = q[r0:r0 + N, :]                      # (N, C)
        kb = k[r0:r0 + N, :]
        vb = v[r0:r0 + N, :]
        # Stack heads along the row (sublane) axis -> (H*N, hd).
        qs = jnp.concatenate([qb[:, hh * hd:(hh + 1) * hd] for hh in range(num_heads)], axis=0)
        ks = jnp.concatenate([kb[:, hh * hd:(hh + 1) * hd] for hh in range(num_heads)], axis=0)
        vs = jnp.concatenate([vb[:, hh * hd:(hh + 1) * hd] for hh in range(num_heads)], axis=0)
        # One score matmul for all heads; cross-head blocks masked to -1e30.
        s = jnp.dot(qs, ks.T, preferred_element_type=jnp.float32) + bias    # (hn, hn)
        p = jax.nn.softmax(s, axis=-1)
        o = jnp.dot(p, vs, preferred_element_type=jnp.float32)              # (hn, hd)
        # Un-stack back to (N, C) with [head0 | head1 | ...] channel order
        # (matches torch's (B, N, num_heads, hd).reshape(B, N, C)).
        per_batch.append(
            jnp.concatenate([o[hh * N:(hh + 1) * N, :] for hh in range(num_heads)], axis=1))
    attn = jnp.concatenate(per_batch, axis=0)                                # (R, C)

    attn = jnp.dot(attn, proj_w_ref[...],
                   preferred_element_type=jnp.float32) + proj_b_ref[...]
    x = x + attn          # residual; DropPath / Dropout(p=0) are identity

    # ---------------- MLP on norm2(x) ----------------
    h2 = _layernorm(x, n2w_ref[...], n2b_ref[...])
    h2 = jnp.dot(h2, fc1_w_ref[...], preferred_element_type=jnp.float32) + fc1_b_ref[...]
    h2 = _gelu_exact(h2)
    h2 = jnp.dot(h2, fc2_w_ref[...], preferred_element_type=jnp.float32) + fc2_b_ref[...]

    # Note: output last dim is C=32 (<128 lanes). Packing rows into a 128-lane
    # view would need an in-kernel cross-tile relayout that costs more than the
    # masked stores it saves at this C, so it is intentionally not done.
    o_ref[...] = (x + h2).astype(o_ref.dtype)


def _batches_per_step(B, N, target_rows=128, min_steps=2):
    """Pick G (batch elems per grid step): big row tiles, but keep >=2 grid
    steps when possible (v7x has 2 TensorCores), and respect the sublane-8
    block constraint on (G*N, C) blocks."""
    max_g = max(1, target_rows // max(N, 1))
    cands = [g for g in range(1, B + 1)
             if B % g == 0 and g <= max_g and ((g * N) % 8 == 0 or g == B)]
    if not cands:
        return B
    pref = [g for g in cands if B // g >= min_steps]
    return max(pref) if pref else max(cands)


def block_forward(x, params, *, num_heads=NUM_HEADS):
    B, N, C = x.shape
    Hm = params["fc1_w"].shape[1]
    hd = C // num_heads
    scale = hd ** -0.5

    G = _batches_per_step(B, N)
    rows = G * N
    grid = (B // G,)

    # (1) Fold batch into the matmul M dimension.
    xf = x.reshape(B * N, C)

    # (3) Fold the 1/sqrt(head_dim) scale into the q columns of the qkv weight.
    qkv_w = jnp.concatenate(
        [params["qkv_w"][:, :C] * jnp.asarray(scale, params["qkv_w"].dtype),
         params["qkv_w"][:, C:]], axis=1)

    # Additive block-diagonal head mask for the stacked-heads score matrix.
    hn = num_heads * N
    blk = jnp.arange(hn) // N
    bias = jnp.where(blk[:, None] == blk[None, :], 0.0, NEG_INF).astype(jnp.float32)

    def full(shape):
        n = len(shape)
        return pl.BlockSpec(shape, lambda i, _n=n: (0,) * _n)

    in_specs = [
        pl.BlockSpec((rows, C), lambda i: (i, 0)),      # x rows (per-step tile)
        full((hn, hn)),                                  # attention head-mask bias
        full((1, C)), full((1, C)),                      # norm1 weight/bias
        full((C, 3 * C)),                                # qkv weight (in,out) layout
        full((C, C)), full((1, C)),                      # proj weight/bias
        full((1, C)), full((1, C)),                      # norm2 weight/bias
        full((C, Hm)), full((1, Hm)),                    # fc1 weight/bias
        full((Hm, C)), full((1, C)),                     # fc2 weight/bias
    ]

    flops = int(2 * B * N * (C * 3 * C + C * C + C * Hm + Hm * C)
                + 4 * B * hn * hn * hd)
    transcendentals = int(B * hn * hn + B * N * Hm)
    weight_bytes = 4 * (C * 3 * C + C * C + C * Hm + Hm * C + 6 * C + Hm + hn * hn)
    bytes_accessed = int(2 * B * N * C * 4 + weight_bytes * grid[0])

    out = pl.pallas_call(
        functools.partial(block_kernel, num_heads=num_heads, seq_len=N),
        out_shape=jax.ShapeDtypeStruct((B * N, C), x.dtype),
        grid_spec=pltpu.PrefetchScalarGridSpec(
            num_scalar_prefetch=0,
            grid=grid,
            in_specs=in_specs,
            out_specs=pl.BlockSpec((rows, C), lambda i: (i, 0)),
        ),
        compiler_params=pltpu.CompilerParams(dimension_semantics=("parallel",)),
        cost_estimate=pl.CostEstimate(flops=flops,
                                      transcendentals=transcendentals,
                                      bytes_accessed=bytes_accessed),
    )(xf, bias, params["n1_w"], params["n1_b"], qkv_w, params["proj_w"],
      params["proj_b"], params["n2_w"], params["n2_b"], params["fc1_w"],
      params["fc1_b"], params["fc2_w"], params["fc2_b"])

    return out.reshape(B, N, C)


def block_reference(x, params, *, num_heads=NUM_HEADS):
    """Pure-JAX reference mirroring the PyTorch forward (eval mode)."""
    B, N, C = x.shape
    hd = C // num_heads
    scale = hd ** -0.5

    def ln(v, w, b):
        mu = jnp.mean(v, axis=-1, keepdims=True)
        var = jnp.mean((v - mu) ** 2, axis=-1, keepdims=True)
        return (v - mu) * jax.lax.rsqrt(var + LN_EPS) * w + b

    h = ln(x, params["n1_w"][0], params["n1_b"][0])
    qkv = h @ params["qkv_w"]
    q, k, v = jnp.split(qkv, 3, axis=-1)
    q = q.reshape(B, N, num_heads, hd).transpose(0, 2, 1, 3)
    k = k.reshape(B, N, num_heads, hd).transpose(0, 2, 1, 3)
    v = v.reshape(B, N, num_heads, hd).transpose(0, 2, 1, 3)
    attn = jax.nn.softmax((q @ k.transpose(0, 1, 3, 2)) * scale, axis=-1)
    out = (attn @ v).transpose(0, 2, 1, 3).reshape(B, N, C)
    out = out @ params["proj_w"] + params["proj_b"][0]
    x = x + out
    h2 = ln(x, params["n2_w"][0], params["n2_b"][0])
    h2 = h2 @ params["fc1_w"] + params["fc1_b"][0]
    h2 = 0.5 * h2 * (1.0 + jax.lax.erf(h2 / jnp.sqrt(2.0)))
    h2 = h2 @ params["fc2_w"] + params["fc2_b"][0]
    return x + h2


if __name__ == "__main__":
    B, N = 2, 8
    C = DIM
    H = int(C * MLP_RATIO)

    key = jax.random.PRNGKey(0)
    ks = jax.random.split(key, 8)

    # Deterministic synthetic parameters. Linear weights stored as (in, out)
    # so the kernel computes y = x @ W + b (equivalent to torch's x @ W.T + b).
    params = {
        "n1_w":   jnp.ones((1, C), jnp.float32),
        "n1_b":   jnp.zeros((1, C), jnp.float32),
        "qkv_w":  0.02 * jax.random.normal(ks[0], (C, 3 * C), jnp.float32),
        "proj_w": 0.02 * jax.random.normal(ks[1], (C, C), jnp.float32),
        "proj_b": 0.02 * jax.random.normal(ks[2], (1, C), jnp.float32),
        "n2_w":   jnp.ones((1, C), jnp.float32),
        "n2_b":   jnp.zeros((1, C), jnp.float32),
        "fc1_w":  0.02 * jax.random.normal(ks[3], (C, H), jnp.float32),
        "fc1_b":  0.02 * jax.random.normal(ks[4], (1, H), jnp.float32),
        "fc2_w":  0.02 * jax.random.normal(ks[5], (H, C), jnp.float32),
        "fc2_b":  0.02 * jax.random.normal(ks[6], (1, C), jnp.float32),
    }
    x = jax.random.normal(ks[7], (B, N, C), jnp.float32)

    out = block_forward(x, params)
    jax.block_until_ready(out)

    ref = block_reference(x, params)
    assert out.shape == (B, N, C)
    assert jnp.allclose(out, ref, atol=1e-4, rtol=1e-4), "kernel/reference mismatch"
    print("KERNEL_OK")
</pallas_src>

<mosaic_0001>
module attributes {stable_mosaic.version = 11 : i64} {
  func.func @block_kernel(%arg0: i32, %arg1: memref<8x32xf32, #tpu.memory_space<vmem>>, %arg2: memref<64x64xf32, #tpu.memory_space<vmem>>, %arg3: memref<1x32xf32, #tpu.memory_space<vmem>>, %arg4: memref<1x32xf32, #tpu.memory_space<vmem>>, %arg5: memref<32x96xf32, #tpu.memory_space<vmem>>, %arg6: memref<32x32xf32, #tpu.memory_space<vmem>>, %arg7: memref<1x32xf32, #tpu.memory_space<vmem>>, %arg8: memref<1x32xf32, #tpu.memory_space<vmem>>, %arg9: memref<1x32xf32, #tpu.memory_space<vmem>>, %arg10: memref<32x128xf32, #tpu.memory_space<vmem>>, %arg11: memref<1x128xf32, #tpu.memory_space<vmem>>, %arg12: memref<128x32xf32, #tpu.memory_space<vmem>>, %arg13: memref<1x32xf32, #tpu.memory_space<vmem>>, %arg14: memref<8x32xf32, #tpu.memory_space<vmem>>) attributes {dimension_semantics = [#tpu.dimension_semantics<parallel>], iteration_bounds = array<i64: 2>, scalar_prefetch = 0 : i64, scratch_operands = 0 : i64, tpu.core_type = #tpu.core_type<tc>, window_params = [{transform_indices = @transform_0, window_bounds = array<i64: 8, 32>}, {pipeline_mode = #tpu.pipeline_mode<synchronous>, transform_indices = @transform_1, window_bounds = array<i64: 64, 64>}, {pipeline_mode = #tpu.pipeline_mode<synchronous>, transform_indices = @transform_2, window_bounds = array<i64: 1, 32>}, {pipeline_mode = #tpu.pipeline_mode<synchronous>, transform_indices = @transform_3, window_bounds = array<i64: 1, 32>}, {pipeline_mode = #tpu.pipeline_mode<synchronous>, transform_indices = @transform_4, window_bounds = array<i64: 32, 96>}, {pipeline_mode = #tpu.pipeline_mode<synchronous>, transform_indices = @transform_5, window_bounds = array<i64: 32, 32>}, {pipeline_mode = #tpu.pipeline_mode<synchronous>, transform_indices = @transform_6, window_bounds = array<i64: 1, 32>}, {pipeline_mode = #tpu.pipeline_mode<synchronous>, transform_indices = @transform_7, window_bounds = array<i64: 1, 32>}, {pipeline_mode = #tpu.pipeline_mode<synchronous>, transform_indices = @transform_8, window_bounds = array<i64: 1, 32>}, {pipeline_mode = #tpu.pipeline_mode<synchronous>, transform_indices = @transform_9, window_bounds = array<i64: 32, 128>}, {pipeline_mode = #tpu.pipeline_mode<synchronous>, transform_indices = @transform_10, window_bounds = array<i64: 1, 128>}, {pipeline_mode = #tpu.pipeline_mode<synchronous>, transform_indices = @transform_11, window_bounds = array<i64: 128, 32>}, {pipeline_mode = #tpu.pipeline_mode<synchronous>, transform_indices = @transform_12, window_bounds = array<i64: 1, 32>}, {transform_indices = @transform_13, window_bounds = array<i64: 8, 32>}]} {
    %c0 = arith.constant 0 : index
    %c0_0 = arith.constant 0 : index
    %0 = vector.load %arg1[%c0, %c0_0] : memref<8x32xf32, #tpu.memory_space<vmem>>, vector<8x32xf32>
    %c0_1 = arith.constant 0 : index
    %c0_2 = arith.constant 0 : index
    %1 = vector.load %arg3[%c0_1, %c0_2] : memref<1x32xf32, #tpu.memory_space<vmem>>, vector<1x32xf32>
    %c0_3 = arith.constant 0 : index
    %c0_4 = arith.constant 0 : index
    %2 = vector.load %arg4[%c0_3, %c0_4] : memref<1x32xf32, #tpu.memory_space<vmem>>, vector<1x32xf32>
    %cst = arith.constant dense<0.000000e+00> : vector<8xf32>
    %3 = vector.multi_reduction <add>, %0, %cst [1] : vector<8x32xf32> to vector<8xf32>
    %4 = vector.shape_cast %3 : vector<8xf32> to vector<8x1xf32>
    %cst_5 = arith.constant 3.200000e+01 : f32
    %5 = vector.broadcast %cst_5 : f32 to vector<8x1xf32>
    %6 = arith.divf %4, %5 : vector<8x1xf32>
    %7 = vector.broadcast %6 : vector<8x1xf32> to vector<8x32xf32>
    %8 = arith.subf %0, %7 : vector<8x32xf32>
    %9 = arith.mulf %8, %8 : vector<8x32xf32>
    %cst_6 = arith.constant dense<0.000000e+00> : vector<8xf32>
    %10 = vector.multi_reduction <add>, %9, %cst_6 [1] : vector<8x32xf32> to vector<8xf32>
    %11 = vector.shape_cast %10 : vector<8xf32> to vector<8x1xf32>
    %cst_7 = arith.constant 3.200000e+01 : f32
    %12 = vector.broadcast %cst_7 : f32 to vector<8x1xf32>
    %13 = arith.divf %11, %12 : vector<8x1xf32>
    %cst_8 = arith.constant 9.99999974E-6 : f32
    %14 = vector.broadcast %cst_8 : f32 to vector<8x1xf32>
    %15 = arith.addf %13, %14 : vector<8x1xf32>
    %16 = math.rsqrt %15 : vector<8x1xf32>
    %17 = vector.broadcast %16 : vector<8x1xf32> to vector<8x32xf32>
    %18 = arith.mulf %8, %17 : vector<8x32xf32>
    %19 = vector.broadcast %1 : vector<1x32xf32> to vector<8x32xf32>
    %20 = arith.mulf %18, %19 : vector<8x32xf32>
    %21 = vector.broadcast %2 : vector<1x32xf32> to vector<8x32xf32>
    %22 = arith.addf %20, %21 : vector<8x32xf32>
    %c0_9 = arith.constant 0 : index
    %c0_10 = arith.constant 0 : index
    %23 = vector.load %arg5[%c0_9, %c0_10] : memref<32x96xf32, #tpu.memory_space<vmem>>, vector<32x96xf32>
    %cst_11 = arith.constant dense<0.000000e+00> : vector<8x96xf32>
    %24 = tpu.matmul %22, %23, %cst_11 {dimension_numbers = #tpu.dot_dimension_numbers<[1], [0], [0], [1], [0, 0, 1, 1], [], []>} : vector<8x32xf32>, vector<32x96xf32>, vector<8x96xf32> -> vector<8x96xf32>
    %25 = vector.extract_strided_slice %24 {offsets = [0, 0], sizes = [8, 32], strides = [1, 1]} : vector<8x96xf32> to vector<8x32xf32>
    %26 = vector.extract_strided_slice %24 {offsets = [0, 32], sizes = [8, 32], strides = [1, 1]} : vector<8x96xf32> to vector<8x32xf32>
    %27 = vector.extract_strided_slice %24 {offsets = [0, 64], sizes = [8, 32], strides = [1, 1]} : vector<8x96xf32> to vector<8x32xf32>
    %c0_12 = arith.constant 0 : index
    %c0_13 = arith.constant 0 : index
    %28 = vector.load %arg2[%c0_12, %c0_13] : memref<64x64xf32, #tpu.memory_space<vmem>>, vector<64x64xf32>
    %29 = vector.extract_strided_slice %25 {offsets = [0, 0], sizes = [8, 4], strides = [1, 1]} : vector<8x32xf32> to vector<8x4xf32>
    %30 = vector.extract_strided_slice %25 {offsets = [0, 4], sizes = [8, 4], strides = [1, 1]} : vector<8x32xf32> to vector<8x4xf32>
    %31 = vector.extract_strided_slice %25 {offsets = [0, 8], sizes = [8, 4], strides = [1, 1]} : vector<8x32xf32> to vector<8x4xf32>
    %32 = vector.extract_strided_slice %25 {offsets = [0, 12], sizes = [8, 4], strides = [1, 1]} : vector<8x32xf32> to vector<8x4xf32>
    %33 = vector.extract_strided_slice %25 {offsets = [0, 16], sizes = [8, 4], strides = [1, 1]} : vector<8x32xf32> to vector<8x4xf32>
    %34 = vector.extract_strided_slice %25 {offsets = [0, 20], sizes = [8, 4], strides = [1, 1]} : vector<8x32xf32> to vector<8x4xf32>
    %35 = vector.extract_strided_slice %25 {offsets = [0, 24], sizes = [8, 4], strides = [1, 1]} : vector<8x32xf32> to vector<8x4xf32>
    %36 = vector.extract_strided_slice %25 {offsets = [0, 28], sizes = [8, 4], strides = [1, 1]} : vector<8x32xf32> to vector<8x4xf32>
    %37 = tpu.concatenate %29, %30, %31, %32, %33, %34, %35, %36 in 0 : vector<8x4xf32>, vector<8x4xf32>, vector<8x4xf32>, vector<8x4xf32>, vector<8x4xf32>, vector<8x4xf32>, vector<8x4xf32>, vector<8x4xf32> -> vector<64x4xf32>
    %38 = vector.extract_strided_slice %26 {offsets = [0, 0], sizes = [8, 4], strides = [1, 1]} : vector<8x32xf32> to vector<8x4xf32>
    %39 = vector.extract_strided_slice %26 {offsets = [0, 4], sizes = [8, 4], strides = [1, 1]} : vector<8x32xf32> to vector<8x4xf32>
    %40 = vector.extract_strided_slice %26 {offsets = [0, 8], sizes = [8, 4], strides = [1, 1]} : vector<8x32xf32> to vector<8x4xf32>
    %41 = vector.extract_strided_slice %26 {offsets = [0, 12], sizes = [8, 4], strides = [1, 1]} : vector<8x32xf32> to vector<8x4xf32>
    %42 = vector.extract_strided_slice %26 {offsets = [0, 16], sizes = [8, 4], strides = [1, 1]} : vector<8x32xf32> to vector<8x4xf32>
    %43 = vector.extract_strided_slice %26 {offsets = [0, 20], sizes = [8, 4], strides = [1, 1]} : vector<8x32xf32> to vector<8x4xf32>
    %44 = vector.extract_strided_slice %26 {offsets = [0, 24], sizes = [8, 4], strides = [1, 1]} : vector<8x32xf32> to vector<8x4xf32>
    %45 = vector.extract_strided_slice %26 {offsets = [0, 28], sizes = [8, 4], strides = [1, 1]} : vector<8x32xf32> to vector<8x4xf32>
    %46 = tpu.concatenate %38, %39, %40, %41, %42, %43, %44, %45 in 0 : vector<8x4xf32>, vector<8x4xf32>, vector<8x4xf32>, vector<8x4xf32>, vector<8x4xf32>, vector<8x4xf32>, vector<8x4xf32>, vector<8x4xf32> -> vector<64x4xf32>
    %47 = vector.extract_strided_slice %27 {offsets = [0, 0], sizes = [8, 4], strides = [1, 1]} : vector<8x32xf32> to vector<8x4xf32>
    %48 = vector.extract_strided_slice %27 {offsets = [0, 4], sizes = [8, 4], strides = [1, 1]} : vector<8x32xf32> to vector<8x4xf32>
    %49 = vector.extract_strided_slice %27 {offsets = [0, 8], sizes = [8, 4], strides = [1, 1]} : vector<8x32xf32> to vector<8x4xf32>
    %50 = vector.extract_strided_slice %27 {offsets = [0, 12], sizes = [8, 4], strides = [1, 1]} : vector<8x32xf32> to vector<8x4xf32>
    %51 = vector.extract_strided_slice %27 {offsets = [0, 16], sizes = [8, 4], strides = [1, 1]} : vector<8x32xf32> to vector<8x4xf32>
    %52 = vector.extract_strided_slice %27 {offsets = [0, 20], sizes = [8, 4], strides = [1, 1]} : vector<8x32xf32> to vector<8x4xf32>
    %53 = vector.extract_strided_slice %27 {offsets = [0, 24], sizes = [8, 4], strides = [1, 1]} : vector<8x32xf32> to vector<8x4xf32>
    %54 = vector.extract_strided_slice %27 {offsets = [0, 28], sizes = [8, 4], strides = [1, 1]} : vector<8x32xf32> to vector<8x4xf32>
    %55 = tpu.concatenate %47, %48, %49, %50, %51, %52, %53, %54 in 0 : vector<8x4xf32>, vector<8x4xf32>, vector<8x4xf32>, vector<8x4xf32>, vector<8x4xf32>, vector<8x4xf32>, vector<8x4xf32>, vector<8x4xf32> -> vector<64x4xf32>
    %56 = tpu.transpose %46, [1, 0] : vector<64x4xf32> -> vector<4x64xf32>
    %cst_14 = arith.constant dense<0.000000e+00> : vector<64x64xf32>
    %57 = tpu.matmul %37, %56, %cst_14 {dimension_numbers = #tpu.dot_dimension_numbers<[1], [0], [0], [1], [0, 0, 1, 1], [], []>} : vector<64x4xf32>, vector<4x64xf32>, vector<64x64xf32> -> vector<64x64xf32>
    %58 = arith.addf %57, %28 : vector<64x64xf32>
    %cst_15 = arith.constant dense<0xFF800000> : vector<64xf32>
    %59 = vector.multi_reduction <maximumf>, %58, %cst_15 [1] : vector<64x64xf32> to vector<64xf32>
    %cst_16 = arith.constant 0xFF800000 : f32
    %60 = vector.broadcast %cst_16 : f32 to vector<64xf32>
    %61 = arith.maximumf %60, %59 : vector<64xf32>
    %62 = vector.shape_cast %61 : vector<64xf32> to vector<64x1xf32>
    %63 = vector.broadcast %62 : vector<64x1xf32> to vector<64x64xf32>
    %64 = arith.subf %58, %63 : vector<64x64xf32>
    %65 = math.exp %64 : vector<64x64xf32>
    %cst_17 = arith.constant dense<0.000000e+00> : vector<64xf32>
    %66 = vector.multi_reduction <add>, %65, %cst_17 [1] : vector<64x64xf32> to vector<64xf32>
    %67 = vector.shape_cast %66 : vector<64xf32> to vector<64x1xf32>
    %68 = vector.broadcast %67 : vector<64x1xf32> to vector<64x64xf32>
    %69 = arith.divf %65, %68 : vector<64x64xf32>
    %cst_18 = arith.constant dense<0.000000e+00> : vector<64x4xf32>
    %70 = tpu.matmul %69, %55, %cst_18 {dimension_numbers = #tpu.dot_dimension_numbers<[1], [0], [0], [1], [0, 0, 1, 1], [], []>} : vector<64x64xf32>, vector<64x4xf32>, vector<64x4xf32> -> vector<64x4xf32>
    %71 = vector.extract_strided_slice %70 {offsets = [0, 0], sizes = [8, 4], strides = [1, 1]} : vector<64x4xf32> to vector<8x4xf32>
    %72 = vector.extract_strided_slice %70 {offsets = [8, 0], sizes = [8, 4], strides = [1, 1]} : vector<64x4xf32> to vector<8x4xf32>
    %73 = vector.extract_strided_slice %70 {offsets = [16, 0], sizes = [8, 4], strides = [1, 1]} : vector<64x4xf32> to vector<8x4xf32>
    %74 = vector.extract_strided_slice %70 {offsets = [24, 0], sizes = [8, 4], strides = [1, 1]} : vector<64x4xf32> to vector<8x4xf32>
    %75 = vector.extract_strided_slice %70 {offsets = [32, 0], sizes = [8, 4], strides = [1, 1]} : vector<64x4xf32> to vector<8x4xf32>
    %76 = vector.extract_strided_slice %70 {offsets = [40, 0], sizes = [8, 4], strides = [1, 1]} : vector<64x4xf32> to vector<8x4xf32>
    %77 = vector.extract_strided_slice %70 {offsets = [48, 0], sizes = [8, 4], strides = [1, 1]} : vector<64x4xf32> to vector<8x4xf32>
    %78 = vector.extract_strided_slice %70 {offsets = [56, 0], sizes = [8, 4], strides = [1, 1]} : vector<64x4xf32> to vector<8x4xf32>
    %79 = tpu.concatenate %71, %72, %73, %74, %75, %76, %77, %78 in 1 : vector<8x4xf32>, vector<8x4xf32>, vector<8x4xf32>, vector<8x4xf32>, vector<8x4xf32>, vector<8x4xf32>, vector<8x4xf32>, vector<8x4xf32> -> vector<8x32xf32>
    %c0_19 = arith.constant 0 : index
    %c0_20 = arith.constant 0 : index
    %80 = vector.load %arg6[%c0_19, %c0_20] : memref<32x32xf32, #tpu.memory_space<vmem>>, vector<32x32xf32>
    %cst_21 = arith.constant dense<0.000000e+00> : vector<8x32xf32>
    %81 = tpu.matmul %79, %80, %cst_21 {dimension_numbers = #tpu.dot_dimension_numbers<[1], [0], [0], [1], [0, 0, 1, 1], [], []>} : vector<8x32xf32>, vector<32x32xf32>, vector<8x32xf32> -> vector<8x32xf32>
    %c0_22 = arith.constant 0 : index
    %c0_23 = arith.constant 0 : index
    %82 = vector.load %arg7[%c0_22, %c0_23] : memref<1x32xf32, #tpu.memory_space<vmem>>, vector<1x32xf32>
    %83 = vector.broadcast %82 : vector<1x32xf32> to vector<8x32xf32>
    %84 = arith.addf %81, %83 : vector<8x32xf32>
    %85 = arith.addf %0, %84 : vector<8x32xf32>
    %c0_24 = arith.constant 0 : index
    %c0_25 = arith.constant 0 : index
    %86 = vector.load %arg8[%c0_24, %c0_25] : memref<1x32xf32, #tpu.memory_space<vmem>>, vector<1x32xf32>
    %c0_26 = arith.constant 0 : index
    %c0_27 = arith.constant 0 : index
    %87 = vector.load %arg9[%c0_26, %c0_27] : memref<1x32xf32, #tpu.memory_space<vmem>>, vector<1x32xf32>
    %cst_28 = arith.constant dense<0.000000e+00> : vector<8xf32>
    %88 = vector.multi_reduction <add>, %85, %cst_28 [1] : vector<8x32xf32> to vector<8xf32>
    %89 = vector.shape_cast %88 : vector<8xf32> to vector<8x1xf32>
    %cst_29 = arith.constant 3.200000e+01 : f32
    %90 = vector.broadcast %cst_29 : f32 to vector<8x1xf32>
    %91 = arith.divf %89, %90 : vector<8x1xf32>
    %92 = vector.broadcast %91 : vector<8x1xf32> to vector<8x32xf32>
    %93 = arith.subf %85, %92 : vector<8x32xf32>
    %94 = arith.mulf %93, %93 : vector<8x32xf32>
    %cst_30 = arith.constant dense<0.000000e+00> : vector<8xf32>
    %95 = vector.multi_reduction <add>, %94, %cst_30 [1] : vector<8x32xf32> to vector<8xf32>
    %96 = vector.shape_cast %95 : vector<8xf32> to vector<8x1xf32>
    %cst_31 = arith.constant 3.200000e+01 : f32
    %97 = vector.broadcast %cst_31 : f32 to vector<8x1xf32>
    %98 = arith.divf %96, %97 : vector<8x1xf32>
    %cst_32 = arith.constant 9.99999974E-6 : f32
    %99 = vector.broadcast %cst_32 : f32 to vector<8x1xf32>
    %100 = arith.addf %98, %99 : vector<8x1xf32>
    %101 = math.rsqrt %100 : vector<8x1xf32>
    %102 = vector.broadcast %101 : vector<8x1xf32> to vector<8x32xf32>
    %103 = arith.mulf %93, %102 : vector<8x32xf32>
    %104 = vector.broadcast %86 : vector<1x32xf32> to vector<8x32xf32>
    %105 = arith.mulf %103, %104 : vector<8x32xf32>
    %106 = vector.broadcast %87 : vector<1x32xf32> to vector<8x32xf32>
    %107 = arith.addf %105, %106 : vector<8x32xf32>
    %c0_33 = arith.constant 0 : index
    %c0_34 = arith.constant 0 : index
    %108 = vector.load %arg10[%c0_33, %c0_34] : memref<32x128xf32, #tpu.memory_space<vmem>>, vector<32x128xf32>
    %cst_35 = arith.constant dense<0.000000e+00> : vector<8x128xf32>
    %109 = tpu.matmul %107, %108, %cst_35 {dimension_numbers = #tpu.dot_dimension_numbers<[1], [0], [0], [1], [0, 0, 1, 1], [], []>} : vector<8x32xf32>, vector<32x128xf32>, vector<8x128xf32> -> vector<8x128xf32>
    %c0_36 = arith.constant 0 : index
    %c0_37 = arith.constant 0 : index
    %110 = vector.load %arg11[%c0_36, %c0_37] : memref<1x128xf32, #tpu.memory_space<vmem>>, vector<1x128xf32>
    %111 = vector.broadcast %110 : vector<1x128xf32> to vector<8x128xf32>
    %112 = arith.addf %109, %111 : vector<8x128xf32>
    %cst_38 = arith.constant 5.000000e-01 : f32
    %113 = vector.broadcast %cst_38 : f32 to vector<8x128xf32>
    %114 = arith.mulf %113, %112 : vector<8x128xf32>
    %cst_39 = arith.constant 2.000000e+00 : f32
    %115 = math.sqrt %cst_39 : f32
    %cst_40 = arith.constant 1.000000e+00 : f32
    %116 = arith.divf %cst_40, %115 : f32
    %117 = vector.broadcast %116 : f32 to vector<8x128xf32>
    %118 = arith.mulf %112, %117 : vector<8x128xf32>
    %119 = math.erf %118 : vector<8x128xf32>
    %cst_41 = arith.constant 1.000000e+00 : f32
    %120 = vector.broadcast %cst_41 : f32 to vector<8x128xf32>
    %121 = arith.addf %120, %119 : vector<8x128xf32>
    %122 = arith.mulf %114, %121 : vector<8x128xf32>
    %c0_42 = arith.constant 0 : index
    %c0_43 = arith.constant 0 : index
    %123 = vector.load %arg12[%c0_42, %c0_43] : memref<128x32xf32, #tpu.memory_space<vmem>>, vector<128x32xf32>
    %cst_44 = arith.constant dense<0.000000e+00> : vector<8x32xf32>
    %124 = tpu.matmul %122, %123, %cst_44 {dimension_numbers = #tpu.dot_dimension_numbers<[1], [0], [0], [1], [0, 0, 1, 1], [], []>} : vector<8x128xf32>, vector<128x32xf32>, vector<8x32xf32> -> vector<8x32xf32>
    %c0_45 = arith.constant 0 : index
    %c0_46 = arith.constant 0 : index
    %125 = vector.load %arg13[%c0_45, %c0_46] : memref<1x32xf32, #tpu.memory_space<vmem>>, vector<1x32xf32>
    %126 = vector.broadcast %125 : vector<1x32xf32> to vector<8x32xf32>
    %127 = arith.addf %124, %126 : vector<8x32xf32>
    %128 = arith.addf %85, %127 : vector<8x32xf32>
    %c0_47 = arith.constant 0 : index
    %c0_48 = arith.constant 0 : index
    %129 = vector.load %arg14[%c0_47, %c0_48] : memref<8x32xf32, #tpu.memory_space<vmem>>, vector<8x32xf32>
    tpu.vector_store %arg14[%c0_47, %c0_48], %128 {strides = array<i32>} : memref<8x32xf32, #tpu.memory_space<vmem>>, vector<8x32xf32>,
    return
  }
  func.func @transform_0(%arg0: i32) -> (i32, i32) {
    %c0_i32 = arith.constant 0 : i32
    %c0_i32_0 = arith.constant 0 : i32
    return %arg0, %c0_i32 : i32, i32
  }
  func.func @transform_1(%arg0: i32) -> (i32, i32) {
    %c0_i32 = arith.constant 0 : i32
    %c0_i32_0 = arith.constant 0 : i32
    %c0_i32_1 = arith.constant 0 : i32
    return %c0_i32, %c0_i32_0 : i32, i32
  }
  func.func @transform_2(%arg0: i32) -> (i32, i32) {
    %c0_i32 = arith.constant 0 : i32
    %c0_i32_0 = arith.constant 0 : i32
    %c0_i32_1 = arith.constant 0 : i32
    return %c0_i32, %c0_i32_0 : i32, i32
  }
  func.func @transform_3(%arg0: i32) -> (i32, i32) {
    %c0_i32 = arith.constant 0 : i32
    %c0_i32_0 = arith.constant 0 : i32
    %c0_i32_1 = arith.constant 0 : i32
    return %c0_i32, %c0_i32_0 : i32, i32
  }
  func.func @transform_4(%arg0: i32) -> (i32, i32) {
    %c0_i32 = arith.constant 0 : i32
    %c0_i32_0 = arith.constant 0 : i32
    %c0_i32_1 = arith.constant 0 : i32
    return %c0_i32, %c0_i32_0 : i32, i32
  }
  func.func @transform_5(%arg0: i32) -> (i32, i32) {
    %c0_i32 = arith.constant 0 : i32
    %c0_i32_0 = arith.constant 0 : i32
    %c0_i32_1 = arith.constant 0 : i32
    return %c0_i32, %c0_i32_0 : i32, i32
  }
  func.func @transform_6(%arg0: i32) -> (i32, i32) {
    %c0_i32 = arith.constant 0 : i32
    %c0_i32_0 = arith.constant 0 : i32
    %c0_i32_1 = arith.constant 0 : i32
    return %c0_i32, %c0_i32_0 : i32, i32
  }
  func.func @transform_7(%arg0: i32) -> (i32, i32) {
    %c0_i32 = arith.constant 0 : i32
    %c0_i32_0 = arith.constant 0 : i32
    %c0_i32_1 = arith.constant 0 : i32
    return %c0_i32, %c0_i32_0 : i32, i32
  }
  func.func @transform_8(%arg0: i32) -> (i32, i32) {
    %c0_i32 = arith.constant 0 : i32
    %c0_i32_0 = arith.constant 0 : i32
    %c0_i32_1 = arith.constant 0 : i32
    return %c0_i32, %c0_i32_0 : i32, i32
  }
  func.func @transform_9(%arg0: i32) -> (i32, i32) {
    %c0_i32 = arith.constant 0 : i32
    %c0_i32_0 = arith.constant 0 : i32
    %c0_i32_1 = arith.constant 0 : i32
    return %c0_i32, %c0_i32_0 : i32, i32
  }
  func.func @transform_10(%arg0: i32) -> (i32, i32) {
    %c0_i32 = arith.constant 0 : i32
    %c0_i32_0 = arith.constant 0 : i32
    %c0_i32_1 = arith.constant 0 : i32
    return %c0_i32, %c0_i32_0 : i32, i32
  }
  func.func @transform_11(%arg0: i32) -> (i32, i32) {
    %c0_i32 = arith.constant 0 : i32
    %c0_i32_0 = arith.constant 0 : i32
    %c0_i32_1 = arith.constant 0 : i32
    return %c0_i32, %c0_i32_0 : i32, i32
  }
  func.func @transform_12(%arg0: i32) -> (i32, i32) {
    %c0_i32 = arith.constant 0 : i32
    %c0_i32_0 = arith.constant 0 : i32
    %c0_i32_1 = arith.constant 0 : i32
    return %c0_i32, %c0_i32_0 : i32, i32
  }
  func.func @transform_13(%arg0: i32) -> (i32, i32) {
    %c0_i32 = arith.constant 0 : i32
    %c0_i32_0 = arith.constant 0 : i32
    return %arg0, %c0_i32 : i32, i32
  }
}

</mosaic_0001>

<llo_original>
// kernel: tpu_custom_call.1
$region0: #{tpu_custom_call.1}
  #allocation0 [shape = 'u32[]', space=smem, size = 0x4, offset = 0x4, fixed_abs, tag = 'smem constant byte address 0x4 - core index']
  #allocation1 [shape = 'u32[72,128]{1,0:T(1,128)}', space=vmem, size = 0x9000, scoped, tag = 'internal scratch']
  %s0 = inlined_call_operand.hbm [shape: f32[16,32], index: 0, kind: input, shape index: {}]
  %s1 = inlined_call_operand.vmem [shape: f32[64,64], index: 1, kind: input, shape index: {}]
  %s2 = inlined_call_operand.vmem [shape: f32[1,32], index: 2, kind: input, shape index: {}]
  %s3 = inlined_call_operand.hbm [shape: f32[1,32], index: 3, kind: input, shape index: {}]
  %s4 = inlined_call_operand.vmem [shape: f32[32,96], index: 4, kind: input, shape index: {}]
  %s5 = inlined_call_operand.vmem [shape: f32[32,32], index: 5, kind: input, shape index: {}]
  %s6 = inlined_call_operand.vmem [shape: f32[1,32], index: 6, kind: input, shape index: {}]
  %s7 = inlined_call_operand.vmem [shape: f32[1,32], index: 7, kind: input, shape index: {}]
  %s8 = inlined_call_operand.vmem [shape: f32[1,32], index: 8, kind: input, shape index: {}]
  %s9 = inlined_call_operand.vmem [shape: f32[32,128], index: 9, kind: input, shape index: {}]
  %s10 = inlined_call_operand.vmem [shape: f32[1,128], index: 10, kind: input, shape index: {}]
  %s11 = inlined_call_operand.vmem [shape: f32[128,32], index: 11, kind: input, shape index: {}]
  %s12 = inlined_call_operand.vmem [shape: f32[1,32], index: 12, kind: input, shape index: {}]
  %s13 = inlined_call_operand.hbm [shape: f32[16,32], index: 13, kind: output, shape index: {}]
  %s14 = sld [smem:[#allocation0]]
  $region93: #{tpu_custom_call.1} parent=0
    _
  %s16 = ssub.s32 1, %s14
  %s17 = scalar_select 0, %s16, %s14
  $region1: #{tpu_custom_call.1} parent=0
    #allocation2 [shape = 'u8[8192]{0}', space=vmem, size = 0x2000, scoped, tag = 'input window, operand 0']
    #allocation3 [shape = 's32[2]{0}', space=sflag, size = 0x8, scoped, tag = 'scoped memory for tpu_custom_call.1']
    #allocation4 [shape = 's32[2]{0}', space=sflag, size = 0x8, scoped, tag = 'scoped memory for tpu_custom_call.1']
    #allocation5 [shape = 'u8[512]{0}', space=vmem, size = 0x400, scoped, tag = 'input window, operand 3, single buffered']
    #allocation6 [shape = 's32[1]{0}', space=sflag, size = 0x4, scoped, tag = 'scoped memory for tpu_custom_call.1']
    #allocation7 [shape = 'u8[8192]{0}', space=vmem, size = 0x2000, scoped, tag = 'output window, operand 0']
    %18 = vsyncpa [#allocation3], 0
    %s19 = scalar_lea.sflag [#allocation3], 1
    %20 = vsyncpa %s19, 0
    %21 = vsyncpa [#allocation6], 0
    %22 = vsyncpa [#allocation4], 0
    %s23 = scalar_lea.sflag [#allocation4], 1
    %24 = vsyncpa %s23, 0
    loop: start=0, step=1, limit=4
    $region2: #{tpu_custom_call.1} parent=1 // loop_pre_header
      _
    $region3: #{tpu_custom_call.1} parent=1 // loop_header
      %s26 = sphi 0, %s30
      %p27 = scmp.ge.s32.totalorder %s26, 4
      %s36 = sphi 0, %s38
      %s39 = sphi 0, %s36
      %s40 = sphi 0, %s39
      %s56 = sphi 0, %s40
      %s60 = sphi 0, %s60
      %s62 = sphi 0, %s60
      %s63 = sphi 0, %s62
      %s77 = sphi 0, %s63
      %s81 = sphi 0, %s81
      %s83 = sphi 0, %s81
      %s84 = sphi 0, %s83
      %s98 = sphi 0, %s84
      %s102 = sphi 0, %s102
      %s104 = sphi 0, %s102
      %s105 = sphi 0, %s104
      %s119 = sphi 0, %s105
      %s123 = sphi 0, %s123
      %s125 = sphi 0, %s123
      %s126 = sphi 0, %s125
      %s140 = sphi 0, %s126
      %s144 = sphi 0, %s144
      %s146 = sphi 0, %s144
      %s147 = sphi 0, %s146
      %s161 = sphi 0, %s147
      %s165 = sphi 0, %s165
      %s167 = sphi 0, %s165
      %s168 = sphi 0, %s167
      %s182 = sphi 0, %s168
      %s186 = sphi 0, %s186
      %s188 = sphi 0, %s186
      %s189 = sphi 0, %s188
      %s203 = sphi 0, %s189
      %s207 = sphi 0, %s207
      %s209 = sphi 0, %s207
      %s210 = sphi 0, %s209
      %s224 = sphi 0, %s210
      %s228 = sphi 0, %s228
      %s230 = sphi 0, %s228
      %s231 = sphi 0, %s230
      %s245 = sphi 0, %s231
      %s249 = sphi 0, %s249
      %s251 = sphi 0, %s249
      %s252 = sphi 0, %s251
      %s266 = sphi 0, %s252
      %s270 = sphi 0, %s270
      %s272 = sphi 0, %s270
      %s273 = sphi 0, %s272
      %s287 = sphi 0, %s273
      %s291 = sphi 0, %s291
      %s293 = sphi 0, %s291
      %s294 = sphi 0, %s293
      %s308 = sphi 0, %s294
      %s314 = sphi 0, %s316
      %s317 = sphi 0, %s314
      %s318 = sphi 0, %s317
      %s334 = sphi 0, %s318
    $region4: #{tpu_custom_call.1} parent=1 // loop_header_branch
      %29 = sbr.rel (%p27) target = $region8
    $region5: #{tpu_custom_call.1} parent=1 // loop_body
      %s31 = ssub.s32 %s26, 1
      %s32 = ssub.s32 %s26, 2
      %s33 = sadd.s32 %s26, 1
      %s34 = ssub.s32 %s26, %s33
      %p35 = scmp.eq.s32.totalorder %s34, 0
      %s37 = sadd.s32 %s36, 1
      %s38 = scalar_select %p35, %s36, %s37
      %p41 = pneg %p35
      %p42 = scmp.eq.s32.totalorder %s26, 1
      %p43 = por %p41, %p42
      %p44 = scmp.ne.s32.totalorder %s36, %s39
      %p45 = scmp.eq.s32.totalorder %s26, 0
      %p46 = por %p44, %p45
      %p47 = scmp.ne.s32.totalorder %s36, %s39
      %p48 = scmp.eq.s32.totalorder %s31, 1
      %p49 = por %p47, %p48
      %p50 = scmp.ne.s32.totalorder %s39, %s40
      %p51 = scmp.eq.s32.totalorder %s31, 0
      %p52 = por %p50, %p51
      %p53 = scmp.ne.s32.totalorder %s39, %s40
      %p54 = scmp.eq.s32.totalorder %s32, 1
      %p55 = por %p53, %p54
      %p57 = scmp.ne.s32.totalorder %s40, %s56
      %p58 = scmp.eq.s32.totalorder %s32, 0
      %p59 = por %p57, %p58
      %s61 = sadd.s32 %s60, 1
      %p64 = scmp.eq.s32.totalorder %s26, 1
      %p65 = scmp.ne.s32.totalorder %s60, %s62
      %p66 = scmp.eq.s32.totalorder %s26, 0
      %p67 = por %p65, %p66
      %p68 = scmp.ne.s32.totalorder %s60, %s62
      %p69 = scmp.eq.s32.totalorder %s31, 1
      %p70 = por %p68, %p69
      %p71 = scmp.ne.s32.totalorder %s62, %s63
      %p72 = scmp.eq.s32.totalorder %s31, 0
      %p73 = por %p71, %p72
      %p74 = scmp.ne.s32.totalorder %s62, %s63
      %p75 = scmp.eq.s32.totalorder %s32, 1
      %p76 = por %p74, %p75
      %p78 = scmp.ne.s32.totalorder %s63, %s77
      %p79 = scmp.eq.s32.totalorder %s32, 0
      %p80 = por %p78, %p79
      %s82 = sadd.s32 %s81, 1
      %p85 = scmp.eq.s32.totalorder %s26, 1
      %p86 = scmp.ne.s32.totalorder %s81, %s83
      %p87 = scmp.eq.s32.totalorder %s26, 0
      %p88 = por %p86, %p87
      %p89 = scmp.ne.s32.totalorder %s81, %s83
      %p90 = scmp.eq.s32.totalorder %s31, 1
      %p91 = por %p89, %p90
      %p92 = scmp.ne.s32.totalorder %s83, %s84
      %p93 = scmp.eq.s32.totalorder %s31, 0
      %p94 = por %p92, %p93
      %p95 = scmp.ne.s32.totalorder %s83, %s84
      %p96 = scmp.eq.s32.totalorder %s32, 1
      %p97 = por %p95, %p96
      %p99 = scmp.ne.s32.totalorder %s84, %s98
      %p100 = scmp.eq.s32.totalorder %s32, 0
      %p101 = por %p99, %p100
      %s103 = sadd.s32 %s102, 1
      %p106 = scmp.eq.s32.totalorder %s26, 1
      %p107 = scmp.ne.s32.totalorder %s102, %s104
      %p108 = scmp.eq.s32.totalorder %s26, 0
      %p109 = por %p107, %p108
      %p110 = scmp.ne.s32.totalorder %s102, %s104
      %p111 = scmp.eq.s32.totalorder %s31, 1
      %p112 = por %p110, %p111
      %p113 = scmp.ne.s32.totalorder %s104, %s105
      %p114 = scmp.eq.s32.totalorder %s31, 0
      %p115 = por %p113, %p114
      %p116 = scmp.ne.s32.totalorder %s104, %s105
      %p117 = scmp.eq.s32.totalorder %s32, 1
      %p118 = por %p116, %p117
      %p120 = scmp.ne.s32.totalorder %s105, %s119
      %p121 = scmp.eq.s32.totalorder %s32, 0
      %p122 = por %p120, %p121
      %s124 = sadd.s32 %s123, 1
      %p127 = scmp.eq.s32.totalorder %s26, 1
      %p128 = scmp.ne.s32.totalorder %s123, %s125
      %p129 = scmp.eq.s32.totalorder %s26, 0
      %p130 = por %p128, %p129
      %p131 = scmp.ne.s32.totalorder %s123, %s125
      %p132 = scmp.eq.s32.totalorder %s31, 1
      %p133 = por %p131, %p132
      %p134 = scmp.ne.s32.totalorder %s125, %s126
      %p135 = scmp.eq.s32.totalorder %s31, 0
      %p136 = por %p134, %p135
      %p137 = scmp.ne.s32.totalorder %s125, %s126
      %p138 = scmp.eq.s32.totalorder %s32, 1
      %p139 = por %p137, %p138
      %p141 = scmp.ne.s32.totalorder %s126, %s140
      %p142 = scmp.eq.s32.totalorder %s32, 0
      %p143 = por %p141, %p142
      %s145 = sadd.s32 %s144, 1
      %p148 = scmp.eq.s32.totalorder %s26, 1
      %p149 = scmp.ne.s32.totalorder %s144, %s146
      %p150 = scmp.eq.s32.totalorder %s26, 0
      %p151 = por %p149, %p150
      %p152 = scmp.ne.s32.totalorder %s144, %s146
      %p153 = scmp.eq.s32.totalorder %s31, 1
      %p154 = por %p152, %p153
      %p155 = scmp.ne.s32.totalorder %s146, %s147
      %p156 = scmp.eq.s32.totalorder %s31, 0
      %p157 = por %p155, %p156
      %p158 = scmp.ne.s32.totalorder %s146, %s147
      %p159 = scmp.eq.s32.totalorder %s32, 1
      %p160 = por %p158, %p159
      %p162 = scmp.ne.s32.totalorder %s147, %s161
      %p163 = scmp.eq.s32.totalorder %s32, 0
      %p164 = por %p162, %p163
      %s166 = sadd.s32 %s165, 1
      %p169 = scmp.eq.s32.totalorder %s26, 1
      %p170 = scmp.ne.s32.totalorder %s165, %s167
      %p171 = scmp.eq.s32.totalorder %s26, 0
      %p172 = por %p170, %p171
      %p173 = scmp.ne.s32.totalorder %s165, %s167
      %p174 = scmp.eq.s32.totalorder %s31, 1
      %p175 = por %p173, %p174
      %p176 = scmp.ne.s32.totalorder %s167, %s168
      %p177 = scmp.eq.s32.totalorder %s31, 0
      %p178 = por %p176, %p177
      %p179 = scmp.ne.s32.totalorder %s167, %s168
      %p180 = scmp.eq.s32.totalorder %s32, 1
      %p181 = por %p179, %p180
      %p183 = scmp.ne.s32.totalorder %s168, %s182
      %p184 = scmp.eq.s32.totalorder %s32, 0
      %p185 = por %p183, %p184
      %s187 = sadd.s32 %s186, 1
      %p190 = scmp.eq.s32.totalorder %s26, 1
      %p191 = scmp.ne.s32.totalorder %s186, %s188
      %p192 = scmp.eq.s32.totalorder %s26, 0
      %p193 = por %p191, %p192
      %p194 = scmp.ne.s32.totalorder %s186, %s188
      %p195 = scmp.eq.s32.totalorder %s31, 1
      %p196 = por %p194, %p195
      %p197 = scmp.ne.s32.totalorder %s188, %s189
      %p198 = scmp.eq.s32.totalorder %s31, 0
      %p199 = por %p197, %p198
      %p200 = scmp.ne.s32.totalorder %s188, %s189
      %p201 = scmp.eq.s32.totalorder %s32, 1
      %p202 = por %p200, %p201
      %p204 = scmp.ne.s32.totalorder %s189, %s203
      %p205 = scmp.eq.s32.totalorder %s32, 0
      %p206 = por %p204, %p205
      %s208 = sadd.s32 %s207, 1
      %p211 = scmp.eq.s32.totalorder %s26, 1
      %p212 = scmp.ne.s32.totalorder %s207, %s209
      %p213 = scmp.eq.s32.totalorder %s26, 0
      %p214 = por %p212, %p213
      %p215 = scmp.ne.s32.totalorder %s207, %s209
      %p216 = scmp.eq.s32.totalorder %s31, 1
      %p217 = por %p215, %p216
      %p218 = scmp.ne.s32.totalorder %s209, %s210
      %p219 = scmp.eq.s32.totalorder %s31, 0
      %p220 = por %p218, %p219
      %p221 = scmp.ne.s32.totalorder %s209, %s210
      %p222 = scmp.eq.s32.totalorder %s32, 1
      %p223 = por %p221, %p222
      %p225 = scmp.ne.s32.totalorder %s210, %s224
      %p226 = scmp.eq.s32.totalorder %s32, 0
      %p227 = por %p225, %p226
      %s229 = sadd.s32 %s228, 1
      %p232 = scmp.eq.s32.totalorder %s26, 1
      %p233 = scmp.ne.s32.totalorder %s228, %s230
      %p234 = scmp.eq.s32.totalorder %s26, 0
      %p235 = por %p233, %p234
      %p236 = scmp.ne.s32.totalorder %s228, %s230
      %p237 = scmp.eq.s32.totalorder %s31, 1
      %p238 = por %p236, %p237
      %p239 = scmp.ne.s32.totalorder %s230, %s231
      %p240 = scmp.eq.s32.totalorder %s31, 0
      %p241 = por %p239, %p240
      %p242 = scmp.ne.s32.totalorder %s230, %s231
      %p243 = scmp.eq.s32.totalorder %s32, 1
      %p244 = por %p242, %p243
      %p246 = scmp.ne.s32.totalorder %s231, %s245
      %p247 = scmp.eq.s32.totalorder %s32, 0
      %p248 = por %p246, %p247
      %s250 = sadd.s32 %s249, 1
      %p253 = scmp.eq.s32.totalorder %s26, 1
      %p254 = scmp.ne.s32.totalorder %s249, %s251
      %p255 = scmp.eq.s32.totalorder %s26, 0
      %p256 = por %p254, %p255
      %p257 = scmp.ne.s32.totalorder %s249, %s251
      %p258 = scmp.eq.s32.totalorder %s31, 1
      %p259 = por %p257, %p258
      %p260 = scmp.ne.s32.totalorder %s251, %s252
      %p261 = scmp.eq.s32.totalorder %s31, 0
      %p262 = por %p260, %p261
      %p263 = scmp.ne.s32.totalorder %s251, %s252
      %p264 = scmp.eq.s32.totalorder %s32, 1
      %p265 = por %p263, %p264
      %p267 = scmp.ne.s32.totalorder %s252, %s266
      %p268 = scmp.eq.s32.totalorder %s32, 0
      %p269 = por %p267, %p268
      %s271 = sadd.s32 %s270, 1
      %p274 = scmp.eq.s32.totalorder %s26, 1
      %p275 = scmp.ne.s32.totalorder %s270, %s272
      %p276 = scmp.eq.s32.totalorder %s26, 0
      %p277 = por %p275, %p276
      %p278 = scmp.ne.s32.totalorder %s270, %s272
      %p279 = scmp.eq.s32.totalorder %s31, 1
      %p280 = por %p278, %p279
      %p281 = scmp.ne.s32.totalorder %s272, %s273
      %p282 = scmp.eq.s32.totalorder %s31, 0
      %p283 = por %p281, %p282
      %p284 = scmp.ne.s32.totalorder %s272, %s273
      %p285 = scmp.eq.s32.totalorder %s32, 1
      %p286 = por %p284, %p285
      %p288 = scmp.ne.s32.totalorder %s273, %s287
      %p289 = scmp.eq.s32.totalorder %s32, 0
      %p290 = por %p288, %p289
      %s292 = sadd.s32 %s291, 1
      %p295 = scmp.eq.s32.totalorder %s26, 1
      %p296 = scmp.ne.s32.totalorder %s291, %s293
      %p297 = scmp.eq.s32.totalorder %s26, 0
      %p298 = por %p296, %p297
      %p299 = scmp.ne.s32.totalorder %s291, %s293
      %p300 = scmp.eq.s32.totalorder %s31, 1
      %p301 = por %p299, %p300
      %p302 = scmp.ne.s32.totalorder %s293, %s294
      %p303 = scmp.eq.s32.totalorder %s31, 0
      %p304 = por %p302, %p303
      %p305 = scmp.ne.s32.totalorder %s293, %s294
      %p306 = scmp.eq.s32.totalorder %s32, 1
      %p307 = por %p305, %p306
      %p309 = scmp.ne.s32.totalorder %s294, %s308
      %p310 = scmp.eq.s32.totalorder %s32, 0
      %p311 = por %p309, %p310
      %s312 = ssub.s32 %s26, %s33
      %p313 = scmp.eq.s32.totalorder %s312, 0
      %s315 = sadd.s32 %s314, 1
      %s316 = scalar_select %p313, %s314, %s315
      %p319 = pneg %p313
      %p320 = scmp.eq.s32.totalorder %s26, 1
      %p321 = por %p319, %p320
      %p322 = scmp.ne.s32.totalorder %s314, %s317
      %p323 = scmp.eq.s32.totalorder %s26, 0
      %p324 = por %p322, %p323
      %p325 = scmp.ne.s32.totalorder %s314, %s317
      %p326 = scmp.eq.s32.totalorder %s31, 1
      %p327 = por %p325, %p326
      %p328 = scmp.ne.s32.totalorder %s317, %s318
      %p329 = scmp.eq.s32.totalorder %s31, 0
      %p330 = por %p328, %p329
      %p331 = scmp.ne.s32.totalorder %s317, %s318
      %p332 = scmp.eq.s32.totalorder %s32, 1
      %p333 = por %p331, %p332
      %p335 = scmp.ne.s32.totalorder %s318, %s334
      %p336 = scmp.eq.s32.totalorder %s32, 0
      %p337 = por %p335, %p336
      %p338 = scmp.le.s32.totalorder 1, %s26
      %p339 = scmp.lt.s32.totalorder %s26, 3
      %p340 = pnand %p338, %p339
      %p341 = pneg %p340
      // Predicated region
      $region9: #{tpu_custom_call.1} parent=5 // pred_check
        _
      $region10: #{tpu_custom_call.1} parent=5 // pred_check_branch
        %343 = sbr.rel (%p340) target = $region12
      $region11: #{tpu_custom_call.1} parent=5 // pred_region
        %s344 = ssub.s32 %s26, 1
        // Predicated region
        $region13: #{tpu_custom_call.1} parent=11 // pred_check
          %p345 = pneg %p73
        $region14: #{tpu_custom_call.1} parent=11 // pred_check_branch
          %347 = sbr.rel (%p345) target = $region16
        $region15: #{tpu_custom_call.1} parent=11 // pred_region
          _
        $region16: #{tpu_custom_call.1} parent=11 // pred_fallthru
          _
        // Predicated region
        $region17: #{tpu_custom_call.1} parent=11 // pred_check
          %p348 = pneg %p94
        $region18: #{tpu_custom_call.1} parent=11 // pred_check_branch
          %350 = sbr.rel (%p348) target = $region20
        $region19: #{tpu_custom_call.1} parent=11 // pred_region
          _
        $region20: #{tpu_custom_call.1} parent=11 // pred_fallthru
          _
        // Predicated region
        $region21: #{tpu_custom_call.1} parent=11 // pred_check
          %p351 = pneg %p115
        $region22: #{tpu_custom_call.1} parent=11 // pred_check_branch
          %353 = sbr.rel (%p351) target = $region24
        $region23: #{tpu_custom_call.1} parent=11 // pred_region
          %355 = vsyncadd [#allocation6], 0
          %s357 = sshll.u32 %s3, 4
          %s358 = int_to_ptr.hbm [resolvable:$true] %s357
          %s359 = sshll.u32 [#allocation5], 4
          %s360 = int_to_ptr.vmem [resolvable:$true] %s359
          %362 = dma.hbm_to_vmem [thread:$0]  %s358, 16, %s360, [#allocation6]
        $region24: #{tpu_custom_call.1} parent=11 // pred_fallthru
          _
        // Predicated region
        $region25: #{tpu_custom_call.1} parent=11 // pred_check
          %p363 = pneg %p136
        $region26: #{tpu_custom_call.1} parent=11 // pred_check_branch
          %365 = sbr.rel (%p363) target = $region28
        $region27: #{tpu_custom_call.1} parent=11 // pred_region
          _
        $region28: #{tpu_custom_call.1} parent=11 // pred_fallthru
          _
        // Predicated region
        $region29: #{tpu_custom_call.1} parent=11 // pred_check
          %p366 = pneg %p157
        $region30: #{tpu_custom_call.1} parent=11 // pred_check_branch
          %368 = sbr.rel (%p366) target = $region32
        $region31: #{tpu_custom_call.1} parent=11 // pred_region
          _
        $region32: #{tpu_custom_call.1} parent=11 // pred_fallthru
          _
        // Predicated region
        $region33: #{tpu_custom_call.1} parent=11 // pred_check
          %p369 = pneg %p178
        $region34: #{tpu_custom_call.1} parent=11 // pred_check_branch
          %371 = sbr.rel (%p369) target = $region36
        $region35: #{tpu_custom_call.1} parent=11 // pred_region
          _
        $region36: #{tpu_custom_call.1} parent=11 // pred_fallthru
          _
        // Predicated region
        $region37: #{tpu_custom_call.1} parent=11 // pred_check
          %p372 = pneg %p199
        $region38: #{tpu_custom_call.1} parent=11 // pred_check_branch
          %374 = sbr.rel (%p372) target = $region40
        $region39: #{tpu_custom_call.1} parent=11 // pred_region
          _
        $region40: #{tpu_custom_call.1} parent=11 // pred_fallthru
          _
        // Predicated region
        $region41: #{tpu_custom_call.1} parent=11 // pred_check
          %p375 = pneg %p220
        $region42: #{tpu_custom_call.1} parent=11 // pred_check_branch
          %377 = sbr.rel (%p375) target = $region44
        $region43: #{tpu_custom_call.1} parent=11 // pred_region
          _
        $region44: #{tpu_custom_call.1} parent=11 // pred_fallthru
          _
        // Predicated region
        $region45: #{tpu_custom_call.1} parent=11 // pred_check
          %p378 = pneg %p241
        $region46: #{tpu_custom_call.1} parent=11 // pred_check_branch
          %380 = sbr.rel (%p378) target = $region48
        $region47: #{tpu_custom_call.1} parent=11 // pred_region
          _
        $region48: #{tpu_custom_call.1} parent=11 // pred_fallthru
          _
        // Predicated region
        $region49: #{tpu_custom_call.1} parent=11 // pred_check
          %p381 = pneg %p262
        $region50: #{tpu_custom_call.1} parent=11 // pred_check_branch
          %383 = sbr.rel (%p381) target = $region52
        $region51: #{tpu_custom_call.1} parent=11 // pred_region
          _
        $region52: #{tpu_custom_call.1} parent=11 // pred_fallthru
          _
        // Predicated region
        $region53: #{tpu_custom_call.1} parent=11 // pred_check
          %p384 = pneg %p283
        $region54: #{tpu_custom_call.1} parent=11 // pred_check_branch
          %386 = sbr.rel (%p384) target = $region56
        $region55: #{tpu_custom_call.1} parent=11 // pred_region
          _
        $region56: #{tpu_custom_call.1} parent=11 // pred_fallthru
          _
        // Predicated region
        $region57: #{tpu_custom_call.1} parent=11 // pred_check
          %p387 = pneg %p304
        $region58: #{tpu_custom_call.1} parent=11 // pred_check_branch
          %389 = sbr.rel (%p387) target = $region60
        $region59: #{tpu_custom_call.1} parent=11 // pred_region
          _
        $region60: #{tpu_custom_call.1} parent=11 // pred_fallthru
          _
      $region12: #{tpu_custom_call.1} parent=5 // pred_fallthru
        _
      %p390 = scmp.lt.s32.totalorder %s26, 2
      // Predicated region
      $region61: #{tpu_custom_call.1} parent=5 // pred_check
        %p391 = pneg %p390
      $region62: #{tpu_custom_call.1} parent=5 // pred_check_branch
        %393 = sbr.rel (%p391) target = $region64
      $region63: #{tpu_custom_call.1} parent=5 // pred_region
        // Predicated region
        $region65: #{tpu_custom_call.1} parent=63 // pred_check
          %p394 = pneg %p46
        $region66: #{tpu_custom_call.1} parent=63 // pred_check_branch
          %396 = sbr.rel (%p394) target = $region68
        $region67: #{tpu_custom_call.1} parent=63 // pred_region
          %s397 = sand.u32 %s36, 1
          %s398 = scalar_lea.sflag [#allocation3], %s397
          %s399 = sand.u32 %s36, 1
          %s400 = smul.addr %s399, 8
          %s401 = scalar_lea.vmem [#allocation2], %s400
          %403 = vsyncadd %s398, 0
          %s404 = smul.addr %s26, 8
          %s405 = scalar_lea.hbm %s0, %s404
          %s407 = sshll.u32 %s405, 4
          %s408 = int_to_ptr.hbm [resolvable:$true] %s407
          %s409 = sshll.u32 %s401, 4
          %s410 = int_to_ptr.vmem [resolvable:$true] %s409
          %412 = dma.hbm_to_vmem [thread:$0]  %s408, 128, %s410, %s398
        $region68: #{tpu_custom_call.1} parent=63 // pred_fallthru
          _
      $region64: #{tpu_custom_call.1} parent=5 // pred_fallthru
        _
      %p413 = scmp.le.s32.totalorder 1, %s26
      %p414 = scmp.lt.s32.totalorder %s26, 3
      %p415 = pnand %p413, %p414
      %p416 = pneg %p415
      // Predicated region
      $region69: #{tpu_custom_call.1} parent=5 // pred_check
        _
      $region70: #{tpu_custom_call.1} parent=5 // pred_check_branch
        %418 = sbr.rel (%p415) target = $region72
      $region71: #{tpu_custom_call.1} parent=5 // pred_region
        %s419 = ssub.s32 %s26, 1
        %s420 = sand.u32 %s39, 1
        %s421 = scalar_lea.sflag [#allocation3], %s420
        %s422 = sand.u32 %s39, 1
        %s423 = smul.addr %s422, 8
        %s424 = scalar_lea.vmem [#allocation2], %s423
        // Predicated region
        $region73: #{tpu_custom_call.1} parent=71 // pred_check
          %p425 = pneg %p52
        $region74: #{tpu_custom_call.1} parent=71 // pred_check_branch
          %427 = sbr.rel (%p425) target = $region76
        $region75: #{tpu_custom_call.1} parent=71 // pred_region
          %429 = dma.done %s421, 128
        $region76: #{tpu_custom_call.1} parent=71 // pred_fallthru
          _
        // Predicated region
        $region77: #{tpu_custom_call.1} parent=71 // pred_check
          %p430 = pneg %p115
        $region78: #{tpu_custom_call.1} parent=71 // pred_check_branch
          %432 = sbr.rel (%p430) target = $region80
        $region79: #{tpu_custom_call.1} parent=71 // pred_region
          %434 = dma.done [#allocation6], 16
        $region80: #{tpu_custom_call.1} parent=71 // pred_fallthru
          _
        %s435 = sand.u32 %s39, 1
        %s436 = scalar_lea.sflag [#allocation3], %s435
        %s437 = sand.u32 %s39, 1
        %s438 = smul.addr %s437, 8
        %s439 = scalar_lea.vmem [#allocation2], %s438
        %p440 = pneg %p52
        %p441 = pneg %p49
        %p442 = pneg %p73
        %p443 = pneg %p70
        %p444 = pneg %p94
        %p445 = pneg %p91
        %p446 = pneg %p115
        %p447 = pneg %p112
        %p448 = pneg %p136
        %p449 = pneg %p133
        %p450 = pneg %p157
        %p451 = pneg %p154
        %p452 = pneg %p178
        %p453 = pneg %p175
        %p454 = pneg %p199
        %p455 = pneg %p196
        %p456 = pneg %p220
        %p457 = pneg %p217
        %p458 = pneg %p241
        %p459 = pneg %p238
        %p460 = pneg %p262
        %p461 = pneg %p259
        %p462 = pneg %p283
        %p463 = pneg %p280
        %p464 = pneg %p304
        %p465 = pneg %p301
        %p466 = pneg %p330
        %p467 = pneg %p327
        %s468 = sand.u32 %s317, 1
        %s469 = scalar_lea.sflag [#allocation4], %s468
        %s470 = sand.u32 %s317, 1
        %s471 = smul.addr %s470, 8
        %s472 = scalar_lea.vmem [#allocation7], %s471
        %v473 = vld [vmem:[%s424] sm:$0xff]
        %v474 = vld [vmem:[%s2] sm:$0x1]
        %v475 = vld [vmem:[#allocation5] sm:$0x1]
        %vm476 = vcmask 261120
        %v477 = vsel %vm476, %v473, 0.0
        %478 = vadd.xlane.f32.xlu0 %v477
        %v479 = vpop.xlane.xlu0 %478
        %v480 = vrcp.pop 32.0
        %v481 = vmul.f32 32.0, %v480
        %v482 = vsub.f32 1.0, %v481
        %v483 = vmul.f32 %v480, %v482
        %v484 = vadd.f32 %v480, %v483
        %vm485 = vweird.f32 %v480
        %v486 = vsel %vm485, %v480, %v484
        %v487 = vmul.f32 %v479, %v486
        %v488 = vsub.f32 %v473, %v487
        %v489 = vmul.f32 %v488, %v488
        %v490 = vsel %vm476, %v489, 0.0
        %491 = vadd.xlane.f32.xlu0 %v490
        %v492 = vpop.xlane.xlu0 %491
        %v493 = vmul.f32 %v492, %v486
        %v494 = vadd.f32 %v493, 1e-05
        %v495 = vrsqrt.pop %v494
        %v496 = vmul.f32 %v495, %v494
        %v497 = vmul.f32 %v496, %v495
        %v498 = vmul.f32 0.5, %v497
        %v499 = vsub.f32 1.5, %v498
        %v500 = vmul.f32 %v495, %v499
        %vm501 = vweird.f32 %v494
        %vm502 = vweird.f32 %v495
        %vm503 = vmor %vm501, %vm502
        %v504 = vsel %vm503, %v495, %v500
        %v505 = vmul.f32 %v488, %v504
        %v507 = vperm.slane %v474, 0
        %v509 = vmul.f32 %v505, %v507
        %v511 = vperm.slane %v475, 0
        %v513 = vadd.f32 %v509, %v511
        %v514 = vld [vmem:[%s4] sm:$0xff]
        %v515 = vld [vmem:[%s4 + $0x8] sm:$0xff]
        %v516 = vld [vmem:[%s4 + $0x10] sm:$0xff]
        %v517 = vld [vmem:[%s4 + $0x18] sm:$0xff]
        %v519 = vsel %vm476, %v513, 0
        %521 = vmatpush.msra.mxu0 0.0
        %522 = vmatpush.msra.mxu0 0.0
        %523 = vmatpush.msra.mxu0 0.0
        %524 = vmatpush.msra.mxu0 0.0
        %525 = vmatpush.msra.mxu0 0.0
        %526 = vmatpush.msra.mxu0 0.0
        %527 = vmatpush.msra.mxu0 0.0
        %528 = vmatpush.msra.mxu0 0.0
        %529 = vmatpush.msra.mxu0 0.0
        %530 = vmatpush.msra.mxu0 0.0
        %531 = vmatpush.msra.mxu0 0.0
        %532 = vmatpush.msra.mxu0 0.0
        %533 = vmatpush.msra.mxu0 %v517
        %534 = vmatpush.msra.mxu0 %v516
        %535 = vmatpush.msra.mxu0 %v515
        %536 = vmatpush.msra.mxu0 %v514
        %537 = vmatmul.f32.gmra.mxu0 %v519
        %v538 = vpop.f32.mrf.mxu0
        %v539 = vadd.f32 0.0, %v538
        %540 = vdwg.mxu0
        %v541 = vld [vmem:[%s1] sm:$0xff]
        %v542 = vld [vmem:[%s1 + $0x8] sm:$0xff]
        %v543 = vld [vmem:[%s1 + $0x10] sm:$0xff]
        %v544 = vld [vmem:[%s1 + $0x18] sm:$0xff]
        %v545 = vld [vmem:[%s1 + $0x20] sm:$0xff]
        %v546 = vld [vmem:[%s1 + $0x28] sm:$0xff]
        %v547 = vld [vmem:[%s1 + $0x30] sm:$0xff]
        %v548 = vld [vmem:[%s1 + $0x38] sm:$0xff]
        %550 = vrot.lane.b32.xlu0 %v539, 124
        %v551 = vpop.permute.xlu0 %550
        %552 = vrot.lane.b32.xlu0 %v539, 120
        %v553 = vpop.permute.xlu0 %552
        %554 = vrot.lane.b32.xlu0 %v539, 116
        %v555 = vpop.permute.xlu0 %554
        %556 = vrot.lane.b32.xlu0 %v539, 112
        %v557 = vpop.permute.xlu0 %556
        %558 = vrot.lane.b32.xlu0 %v539, 108
        %v559 = vpop.permute.xlu0 %558
        %560 = vrot.lane.b32.xlu0 %v539, 104
        %v561 = vpop.permute.xlu0 %560
        %562 = vrot.lane.b32.xlu0 %v539, 100
        %v563 = vpop.permute.xlu0 %562
        %564 = vrot.lane.b32.xlu0 %v539, 96
        %v565 = vpop.permute.xlu0 %564
        %566 = vrot.lane.b32.xlu0 %v551, 96
        %v567 = vpop.permute.xlu0 %566
        %568 = vrot.lane.b32.xlu0 %v553, 96
        %v569 = vpop.permute.xlu0 %568
        %570 = vrot.lane.b32.xlu0 %v555, 96
        %v571 = vpop.permute.xlu0 %570
        %572 = vrot.lane.b32.xlu0 %v557, 96
        %v573 = vpop.permute.xlu0 %572
        %574 = vrot.lane.b32.xlu0 %v559, 96
        %v575 = vpop.permute.xlu0 %574
        %576 = vrot.lane.b32.xlu0 %v561, 96
        %v577 = vpop.permute.xlu0 %576
        %578 = vrot.lane.b32.xlu0 %v563, 96
        %v579 = vpop.permute.xlu0 %578
        %vm580 = vcmask 31744
        %v581 = vsel %vm580, %v539, 0
        %v583 = vsel %vm580, %v551, 0
        %v585 = vsel %vm580, %v553, 0
        %v587 = vsel %vm580, %v555, 0
        %v589 = vsel %vm580, %v557, 0
        %v591 = vsel %vm580, %v559, 0
        %v593 = vsel %vm580, %v561, 0
        %v595 = vsel %vm580, %v563, 0
        %v597 = vsel %vm580, %v565, 0
        %v599 = vsel %vm580, %v567, 0
        %v601 = vsel %vm580, %v569, 0
        %v603 = vsel %vm580, %v571, 0
        %v605 = vsel %vm580, %v573, 0
        %v607 = vsel %vm580, %v575, 0
        %v609 = vsel %vm580, %v577, 0
        %v611 = vsel %vm580, %v579, 0
        %613 = vmatpush.xpose.msra.mxu0 0.0
        %614 = vmatpush.xpose.msra.mxu0 0.0
        %615 = vmatpush.xpose.msra.mxu0 0.0
        %616 = vmatpush.xpose.msra.mxu0 0.0
        %617 = vmatpush.xpose.msra.mxu0 0.0
        %618 = vmatpush.xpose.msra.mxu0 0.0
        %619 = vmatpush.xpose.msra.mxu0 0.0
        %620 = vmatpush.xpose.msra.mxu0 0.0
        %621 = vmatpush.xpose.msra.mxu0 %v611
        %622 = vmatpush.xpose.msra.mxu0 %v609
        %623 = vmatpush.xpose.msra.mxu0 %v607
        %624 = vmatpush.xpose.msra.mxu0 %v605
        %625 = vmatpush.xpose.msra.mxu0 %v603
        %626 = vmatpush.xpose.msra.mxu0 %v601
        %627 = vmatpush.xpose.msra.mxu0 %v599
        %628 = vmatpush.xpose.msra.mxu0 %v597
        %629 = vmatmul.f32.gmra.mxu0 %v581
        %v630 = vpop.f32.mrf.mxu0
        %v631 = vadd.f32 %v541, %v630
        %632 = vmatmul.f32.gmra.mxu0 %v583
        %v633 = vpop.f32.mrf.mxu0
        %v634 = vadd.f32 %v542, %v633
        %635 = vmatmul.f32.gmra.mxu0 %v585
        %v636 = vpop.f32.mrf.mxu0
        %v637 = vadd.f32 %v543, %v636
        %638 = vmatmul.f32.gmra.mxu0 %v587
        %v639 = vpop.f32.mrf.mxu0
        %v640 = vadd.f32 %v544, %v639
        %641 = vmatmul.f32.gmra.mxu0 %v589
        %v642 = vpop.f32.mrf.mxu0
        %v643 = vadd.f32 %v545, %v642
        %644 = vmatmul.f32.gmra.mxu0 %v591
        %v645 = vpop.f32.mrf.mxu0
        %v646 = vadd.f32 %v546, %v645
        %647 = vmatmul.f32.gmra.mxu0 %v593
        %v648 = vpop.f32.mrf.mxu0
        %v649 = vadd.f32 %v547, %v648
        %650 = vmatmul.f32.gmra.mxu0 %v595
        %v651 = vpop.f32.mrf.mxu0
        %v652 = vadd.f32 %v548, %v651
        %653 = vdwg.mxu0
        %vm654 = vcmask 523264
        %v655 = vsel %vm654, %v631, -inf
        %656 = vmax.xlane.f32.xlu0 %v655
        %v657 = vpop.xlane.xlu0 %656
        %v658 = vsel %vm654, %v634, -inf
        %659 = vmax.xlane.f32.xlu0 %v658
        %v660 = vpop.xlane.xlu0 %659
        %v661 = vsel %vm654, %v637, -inf
        %662 = vmax.xlane.f32.xlu0 %v661
        %v663 = vpop.xlane.xlu0 %662
        %v664 = vsel %vm654, %v640, -inf
        %665 = vmax.xlane.f32.xlu0 %v664
        %v666 = vpop.xlane.xlu0 %665
        %v667 = vsel %vm654, %v643, -inf
        %668 = vmax.xlane.f32.xlu0 %v667
        %v669 = vpop.xlane.xlu0 %668
        %v670 = vsel %vm654, %v646, -inf
        %671 = vmax.xlane.f32.xlu0 %v670
        %v672 = vpop.xlane.xlu0 %671
        %v673 = vsel %vm654, %v649, -inf
        %674 = vmax.xlane.f32.xlu0 %v673
        %v675 = vpop.xlane.xlu0 %674
        %v676 = vsel %vm654, %v652, -inf
        %677 = vmax.xlane.f32.xlu0 %v676
        %v678 = vpop.xlane.xlu0 %677
        %v679 = vsub.f32 %v631, %v657
        %v680 = vsub.f32 %v634, %v660
        %v681 = vsub.f32 %v637, %v663
        %v682 = vsub.f32 %v640, %v666
        %v683 = vsub.f32 %v643, %v669
        %v684 = vsub.f32 %v646, %v672
        %v685 = vsub.f32 %v649, %v675
        %v686 = vsub.f32 %v652, %v678
        %v687 = vmul.f32 %v679, 1.442695
        %v688 = vpow.pop %v687
        %v689 = vmul.f32 %v680, 1.442695
        %v690 = vpow.pop %v689
        %v691 = vmul.f32 %v681, 1.442695
        %v692 = vpow.pop %v691
        %v693 = vmul.f32 %v682, 1.442695
        %v694 = vpow.pop %v693
        %v695 = vmul.f32 %v683, 1.442695
        %v696 = vpow.pop %v695
        %v697 = vmul.f32 %v684, 1.442695
        %v698 = vpow.pop %v697
        %v699 = vmul.f32 %v685, 1.442695
        %v700 = vpow.pop %v699
        %v701 = vmul.f32 %v686, 1.442695
        %v702 = vpow.pop %v701
        %v703 = vsel %vm654, %v688, 0.0
        %704 = vadd.xlane.f32.xlu0 %v703
        %v705 = vpop.xlane.xlu0 %704
        %v706 = vsel %vm654, %v690, 0.0
        %707 = vadd.xlane.f32.xlu0 %v706
        %v708 = vpop.xlane.xlu0 %707
        %v709 = vsel %vm654, %v692, 0.0
        %710 = vadd.xlane.f32.xlu0 %v709
        %v711 = vpop.xlane.xlu0 %710
        %v712 = vsel %vm654, %v694, 0.0
        %713 = vadd.xlane.f32.xlu0 %v712
        %v714 = vpop.xlane.xlu0 %713
        %v715 = vsel %vm654, %v696, 0.0
        %716 = vadd.xlane.f32.xlu0 %v715
        %v717 = vpop.xlane.xlu0 %716
        %v718 = vsel %vm654, %v698, 0.0
        %719 = vadd.xlane.f32.xlu0 %v718
        %v720 = vpop.xlane.xlu0 %719
        %v721 = vsel %vm654, %v700, 0.0
        %722 = vadd.xlane.f32.xlu0 %v721
        %v723 = vpop.xlane.xlu0 %722
        %v724 = vsel %vm654, %v702, 0.0
        %725 = vadd.xlane.f32.xlu0 %v724
        %v726 = vpop.xlane.xlu0 %725
        %v727 = vrcp.pop %v705
        %v728 = vmul.f32 %v705, %v727
        %v729 = vsub.f32 1.0, %v728
        %v730 = vmul.f32 %v727, %v729
        %v731 = vadd.f32 %v727, %v730
        %vm732 = vweird.f32 %v705
        %vm733 = vweird.f32 %v727
        %vm734 = vmor %vm732, %vm733
        %v735 = vsel %vm734, %v727, %v731
        %v736 = vand.u32 2147483647, %v705
        %vm737 = vcmp.eq.f32.partialorder %v736, 8.507059e+37
        %v738 = vand.u32 %v705, 2147483648
        %v739 = vor.u32 1.1754944e-38, %v738
        %v740 = vsel %vm737, %v739, %v735
        %v741 = vmul.f32 %v688, %v740
        %v742 = vrcp.pop %v708
        %v743 = vmul.f32 %v708, %v742
        %v744 = vsub.f32 1.0, %v743
        %v745 = vmul.f32 %v742, %v744
        %v746 = vadd.f32 %v742, %v745
        %vm747 = vweird.f32 %v708
        %vm748 = vweird.f32 %v742
        %vm749 = vmor %vm747, %vm748
        %v750 = vsel %vm749, %v742, %v746
        %v751 = vand.u32 2147483647, %v708
        %vm752 = vcmp.eq.f32.partialorder %v751, 8.507059e+37
        %v753 = vand.u32 %v708, 2147483648
        %v754 = vor.u32 1.1754944e-38, %v753
        %v755 = vsel %vm752, %v754, %v750
        %v756 = vmul.f32 %v690, %v755
        %v757 = vrcp.pop %v711
        %v758 = vmul.f32 %v711, %v757
        %v759 = vsub.f32 1.0, %v758
        %v760 = vmul.f32 %v757, %v759
        %v761 = vadd.f32 %v757, %v760
        %vm762 = vweird.f32 %v711
        %vm763 = vweird.f32 %v757
        %vm764 = vmor %vm762, %vm763
        %v765 = vsel %vm764, %v757, %v761
        %v766 = vand.u32 2147483647, %v711
        %vm767 = vcmp.eq.f32.partialorder %v766, 8.507059e+37
        %v768 = vand.u32 %v711, 2147483648
        %v769 = vor.u32 1.1754944e-38, %v768
        %v770 = vsel %vm767, %v769, %v765
        %v771 = vmul.f32 %v692, %v770
        %v772 = vrcp.pop %v714
        %v773 = vmul.f32 %v714, %v772
        %v774 = vsub.f32 1.0, %v773
        %v775 = vmul.f32 %v772, %v774
        %v776 = vadd.f32 %v772, %v775
        %vm777 = vweird.f32 %v714
        %vm778 = vweird.f32 %v772
        %vm779 = vmor %vm777, %vm778
        %v780 = vsel %vm779, %v772, %v776
        %v781 = vand.u32 2147483647, %v714
        %vm782 = vcmp.eq.f32.partialorder %v781, 8.507059e+37
        %v783 = vand.u32 %v714, 2147483648
        %v784 = vor.u32 1.1754944e-38, %v783
        %v785 = vsel %vm782, %v784, %v780
        %v786 = vmul.f32 %v694, %v785
        %v787 = vrcp.pop %v717
        %v788 = vmul.f32 %v717, %v787
        %v789 = vsub.f32 1.0, %v788
        %v790 = vmul.f32 %v787, %v789
        %v791 = vadd.f32 %v787, %v790
        %vm792 = vweird.f32 %v717
        %vm793 = vweird.f32 %v787
        %vm794 = vmor %vm792, %vm793
        %v795 = vsel %vm794, %v787, %v791
        %v796 = vand.u32 2147483647, %v717
        %vm797 = vcmp.eq.f32.partialorder %v796, 8.507059e+37
        %v798 = vand.u32 %v717, 2147483648
        %v799 = vor.u32 1.1754944e-38, %v798
        %v800 = vsel %vm797, %v799, %v795
        %v801 = vmul.f32 %v696, %v800
        %v802 = vrcp.pop %v720
        %v803 = vmul.f32 %v720, %v802
        %v804 = vsub.f32 1.0, %v803
        %v805 = vmul.f32 %v802, %v804
        %v806 = vadd.f32 %v802, %v805
        %vm807 = vweird.f32 %v720
        %vm808 = vweird.f32 %v802
        %vm809 = vmor %vm807, %vm808
        %v810 = vsel %vm809, %v802, %v806
        %v811 = vand.u32 2147483647, %v720
        %vm812 = vcmp.eq.f32.partialorder %v811, 8.507059e+37
        %v813 = vand.u32 %v720, 2147483648
        %v814 = vor.u32 1.1754944e-38, %v813
        %v815 = vsel %vm812, %v814, %v810
        %v816 = vmul.f32 %v698, %v815
        %v817 = vrcp.pop %v723
        %v818 = vmul.f32 %v723, %v817
        %v819 = vsub.f32 1.0, %v818
        %v820 = vmul.f32 %v817, %v819
        %v821 = vadd.f32 %v817, %v820
        %vm822 = vweird.f32 %v723
        %vm823 = vweird.f32 %v817
        %vm824 = vmor %vm822, %vm823
        %v825 = vsel %vm824, %v817, %v821
        %v826 = vand.u32 2147483647, %v723
        %vm827 = vcmp.eq.f32.partialorder %v826, 8.507059e+37
        %v828 = vand.u32 %v723, 2147483648
        %v829 = vor.u32 1.1754944e-38, %v828
        %v830 = vsel %vm827, %v829, %v825
        %v831 = vmul.f32 %v700, %v830
        %v832 = vrcp.pop %v726
        %v833 = vmul.f32 %v726, %v832
        %v834 = vsub.f32 1.0, %v833
        %v835 = vmul.f32 %v832, %v834
        %v836 = vadd.f32 %v832, %v835
        %vm837 = vweird.f32 %v726
        %vm838 = vweird.f32 %v832
        %vm839 = vmor %vm837, %vm838
        %v840 = vsel %vm839, %v832, %v836
        %v841 = vand.u32 2147483647, %v726
        %vm842 = vcmp.eq.f32.partialorder %v841, 8.507059e+37
        %v843 = vand.u32 %v726, 2147483648
        %v844 = vor.u32 1.1754944e-38, %v843
        %v845 = vsel %vm842, %v844, %v840
        %v846 = vmul.f32 %v702, %v845
        %847 = vrot.lane.b32.xlu0 %v539, 64
        %v848 = vpop.permute.xlu0 %847
        %849 = vrot.lane.b32.xlu0 %v551, 64
        %v850 = vpop.permute.xlu0 %849
        %851 = vrot.lane.b32.xlu0 %v553, 64
        %v852 = vpop.permute.xlu0 %851
        %853 = vrot.lane.b32.xlu0 %v555, 64
        %v854 = vpop.permute.xlu0 %853
        %855 = vrot.lane.b32.xlu0 %v557, 64
        %v856 = vpop.permute.xlu0 %855
        %857 = vrot.lane.b32.xlu0 %v559, 64
        %v858 = vpop.permute.xlu0 %857
        %859 = vrot.lane.b32.xlu0 %v561, 64
        %v860 = vpop.permute.xlu0 %859
        %861 = vrot.lane.b32.xlu0 %v563, 64
        %v862 = vpop.permute.xlu0 %861
        %v872 = vsel %vm654, %v741, 0
        %v875 = vsel %vm654, %v756, 0
        %v878 = vsel %vm654, %v771, 0
        %v881 = vsel %vm654, %v786, 0
        %v884 = vsel %vm654, %v801, 0
        %v887 = vsel %vm654, %v816, 0
        %v890 = vsel %vm654, %v831, 0
        %v893 = vsel %vm654, %v846, 0
        %895 = vmatpush.msra.mxu0 0.0
        %896 = vmatpush.msra.mxu0 0.0
        %897 = vmatpush.msra.mxu0 0.0
        %898 = vmatpush.msra.mxu0 0.0
        %899 = vmatpush.msra.mxu0 0.0
        %900 = vmatpush.msra.mxu0 0.0
        %901 = vmatpush.msra.mxu0 0.0
        %902 = vmatpush.msra.mxu0 0.0
        %903 = vmatpush.msra.mxu0 %v862
        %904 = vmatpush.msra.mxu0 %v860
        %905 = vmatpush.msra.mxu0 %v858
        %906 = vmatpush.msra.mxu0 %v856
        %907 = vmatpush.msra.mxu0 %v854
        %908 = vmatpush.msra.mxu0 %v852
        %909 = vmatpush.msra.mxu0 %v850
        %910 = vmatpush.msra.mxu0 %v848
        %911 = vmatmul.f32.gmra.mxu0 %v872
        %v912 = vpop.f32.mrf.mxu0
        %v913 = vadd.f32 0.0, %v912
        %914 = vmatmul.f32.gmra.mxu0 %v875
        %v915 = vpop.f32.mrf.mxu0
        %v916 = vadd.f32 0.0, %v915
        %917 = vmatmul.f32.gmra.mxu0 %v878
        %v918 = vpop.f32.mrf.mxu0
        %v919 = vadd.f32 0.0, %v918
        %920 = vmatmul.f32.gmra.mxu0 %v881
        %v921 = vpop.f32.mrf.mxu0
        %v922 = vadd.f32 0.0, %v921
        %923 = vmatmul.f32.gmra.mxu0 %v884
        %v924 = vpop.f32.mrf.mxu0
        %v925 = vadd.f32 0.0, %v924
        %926 = vmatmul.f32.gmra.mxu0 %v887
        %v927 = vpop.f32.mrf.mxu0
        %v928 = vadd.f32 0.0, %v927
        %929 = vmatmul.f32.gmra.mxu0 %v890
        %v930 = vpop.f32.mrf.mxu0
        %v931 = vadd.f32 0.0, %v930
        %932 = vmatmul.f32.gmra.mxu0 %v893
        %v933 = vpop.f32.mrf.mxu0
        %v934 = vadd.f32 0.0, %v933
        %935 = vdwg.mxu0
        %937 = vrot.lane.b32.xlu0 %v916, 4
        %v938 = vpop.permute.xlu0 %937
        %941 = vrot.lane.b32.xlu0 %v919, 8
        %v942 = vpop.permute.xlu0 %941
        %945 = vrot.lane.b32.xlu0 %v922, 12
        %v946 = vpop.permute.xlu0 %945
        %949 = vrot.lane.b32.xlu0 %v925, 16
        %v950 = vpop.permute.xlu0 %949
        %953 = vrot.lane.b32.xlu0 %v928, 20
        %v954 = vpop.permute.xlu0 %953
        %957 = vrot.lane.b32.xlu0 %v931, 24
        %v958 = vpop.permute.xlu0 %957
        %961 = vrot.lane.b32.xlu0 %v934, 28
        %v962 = vpop.permute.xlu0 %961
        %v964 = vsel %vm580, %v913, %v938
        %vm965 = vcmask 64512
        %v966 = vsel %vm965, %v964, %v942
        %vm967 = vcmask 97280
        %v968 = vsel %vm967, %v966, %v946
        %vm969 = vcmask 130048
        %v970 = vsel %vm969, %v968, %v950
        %vm971 = vcmask 162816
        %v972 = vsel %vm971, %v970, %v954
        %vm973 = vcmask 195584
        %v974 = vsel %vm973, %v972, %v958
        %vm975 = vcmask 228352
        %v976 = vsel %vm975, %v974, %v962
        %v977 = vld [vmem:[%s5] sm:$0xff]
        %v978 = vld [vmem:[%s5 + $0x8] sm:$0xff]
        %v979 = vld [vmem:[%s5 + $0x10] sm:$0xff]
        %v980 = vld [vmem:[%s5 + $0x18] sm:$0xff]
        %v981 = vld [vmem:[%s6] sm:$0x1]
        %v983 = vperm.slane %v981, 0
        %v986 = vsel %vm476, %v976, 0
        %988 = vmatpush.msra.mxu0 0.0
        %989 = vmatpush.msra.mxu0 0.0
        %990 = vmatpush.msra.mxu0 0.0
        %991 = vmatpush.msra.mxu0 0.0
        %992 = vmatpush.msra.mxu0 0.0
        %993 = vmatpush.msra.mxu0 0.0
        %994 = vmatpush.msra.mxu0 0.0
        %995 = vmatpush.msra.mxu0 0.0
        %996 = vmatpush.msra.mxu0 0.0
        %997 = vmatpush.msra.mxu0 0.0
        %998 = vmatpush.msra.mxu0 0.0
        %999 = vmatpush.msra.mxu0 0.0
        %1000 = vmatpush.msra.mxu0 %v980
        %1001 = vmatpush.msra.mxu0 %v979
        %1002 = vmatpush.msra.mxu0 %v978
        %1003 = vmatpush.msra.mxu0 %v977
        %1004 = vmatmul.f32.gmra.mxu0 %v986
        %v1005 = vpop.f32.mrf.mxu0
        %v1006 = vadd.f32 %v983, %v1005
        %1007 = vdwg.mxu0
        %v1008 = vadd.f32 %v473, %v1006
        %v1009 = vld [vmem:[%s7] sm:$0x1]
        %v1010 = vld [vmem:[%s8] sm:$0x1]
        %v1011 = vsel %vm476, %v1008, 0.0
        %1012 = vadd.xlane.f32.xlu0 %v1011
        %v1013 = vpop.xlane.xlu0 %1012
        %v1014 = vmul.f32 %v1013, %v486
        %v1015 = vsub.f32 %v1008, %v1014
        %v1016 = vmul.f32 %v1015, %v1015
        %v1017 = vsel %vm476, %v1016, 0.0
        %1018 = vadd.xlane.f32.xlu0 %v1017
        %v1019 = vpop.xlane.xlu0 %1018
        %v1020 = vmul.f32 %v1019, %v486
        %v1021 = vadd.f32 %v1020, 1e-05
        %v1022 = vrsqrt.pop %v1021
        %v1023 = vmul.f32 %v1022, %v1021
        %v1024 = vmul.f32 %v1023, %v1022
        %v1025 = vmul.f32 0.5, %v1024
        %v1026 = vsub.f32 1.5, %v1025
        %v1027 = vmul.f32 %v1022, %v1026
        %vm1028 = vweird.f32 %v1021
        %vm1029 = vweird.f32 %v1022
        %vm1030 = vmor %vm1028, %vm1029
        %v1031 = vsel %vm1030, %v1022, %v1027
        %v1032 = vmul.f32 %v1015, %v1031
        %v1034 = vperm.slane %v1009, 0
        %v1036 = vmul.f32 %v1032, %v1034
        %v1038 = vperm.slane %v1010, 0
        %v1040 = vadd.f32 %v1036, %v1038
        %v1041 = vld [vmem:[%s9] sm:$0xff]
        %v1042 = vld [vmem:[%s9 + $0x8] sm:$0xff]
        %v1043 = vld [vmem:[%s9 + $0x10] sm:$0xff]
        %v1044 = vld [vmem:[%s9 + $0x18] sm:$0xff]
        %v1045 = vld [vmem:[%s10] sm:$0x1]
        %v1047 = vperm.slane %v1045, 0
        %v1050 = vsel %vm476, %v1040, 0
        %1052 = vmatpush.msra.mxu0 0.0
        %1053 = vmatpush.msra.mxu0 0.0
        %1054 = vmatpush.msra.mxu0 0.0
        %1055 = vmatpush.msra.mxu0 0.0
        %1056 = vmatpush.msra.mxu0 0.0
        %1057 = vmatpush.msra.mxu0 0.0
        %1058 = vmatpush.msra.mxu0 0.0
        %1059 = vmatpush.msra.mxu0 0.0
        %1060 = vmatpush.msra.mxu0 0.0
        %1061 = vmatpush.msra.mxu0 0.0
        %1062 = vmatpush.msra.mxu0 0.0
        %1063 = vmatpush.msra.mxu0 0.0
        %1064 = vmatpush.msra.mxu0 %v1044
        %1065 = vmatpush.msra.mxu0 %v1043
        %1066 = vmatpush.msra.mxu0 %v1042
        %1067 = vmatpush.msra.mxu0 %v1041
        %1068 = vmatmul.f32.gmra.mxu0 %v1050
        %v1069 = vpop.f32.mrf.mxu0
        %v1070 = vadd.f32 %v1047, %v1069
        %1071 = vdwg.mxu0
        %v1072 = vmul.f32 %v1070, 0.5
        %v1073 = vmul.f32 %v1070, 0.70710677
        %v1074 = vmul.f32 %v1073, %v1073
        %v1075 = vmin.f32 16.0, %v1074
        %v1076 = vmul.f32 %v1075, 2.1237322e-06
        %v1077 = vadd.f32 %v1076, 0.00028619796
        %v1078 = vmul.f32 %v1075, %v1077
        %v1079 = vadd.f32 %v1078, 0.0036580483
        %v1080 = vmul.f32 %v1075, %v1079
        %v1081 = vadd.f32 %v1080, 0.05243302
        %v1082 = vmul.f32 %v1075, %v1081
        %v1083 = vadd.f32 %v1082, 0.18741608
        %v1084 = vmul.f32 %v1075, %v1083
        %v1085 = vadd.f32 %v1084, 1.1283791
        %v1086 = vmul.f32 %v1073, %v1085
        %v1087 = vmul.f32 %v1075, 3.8918573e-05
        %v1088 = vadd.f32 %v1087, 0.001143296
        %v1089 = vmul.f32 %v1075, %v1088
        %v1090 = vadd.f32 %v1089, 0.014752088
        %v1091 = vmul.f32 %v1075, %v1090
        %v1092 = vadd.f32 %v1091, 0.112945676
        %v1093 = vmul.f32 %v1075, %v1092
        %v1094 = vadd.f32 %v1093, 0.4994258
        %v1095 = vmul.f32 %v1075, %v1094
        %v1096 = vadd.f32 %v1095, 1.0
        %v1097 = vrcp.pop %v1096
        %v1098 = vmul.f32 %v1096, %v1097
        %v1099 = vsub.f32 1.0, %v1098
        %v1100 = vmul.f32 %v1097, %v1099
        %v1101 = vadd.f32 %v1097, %v1100
        %vm1102 = vweird.f32 %v1096
        %vm1103 = vweird.f32 %v1097
        %vm1104 = vmor %vm1102, %vm1103
        %v1105 = vsel %vm1104, %v1097, %v1101
        %v1106 = vand.u32 2147483647, %v1096
        %vm1107 = vcmp.eq.f32.partialorder %v1106, 8.507059e+37
        %v1108 = vand.u32 %v1096, 2147483648
        %v1109 = vor.u32 1.1754944e-38, %v1108
        %v1110 = vsel %vm1107, %v1109, %v1105
        %v1111 = vmul.f32 %v1086, %v1110
        %v1112 = vmin.f32 %v1111, 1.0
        %v1113 = vmax.f32 %v1112, -1.0
        %v1114 = vadd.f32 %v1113, 1.0
        %v1115 = vmul.f32 %v1072, %v1114
        %v1116 = vld [vmem:[%s11] sm:$0xff]
        %v1117 = vld [vmem:[%s11 + $0x8] sm:$0xff]
        %v1118 = vld [vmem:[%s11 + $0x10] sm:$0xff]
        %v1119 = vld [vmem:[%s11 + $0x18] sm:$0xff]
        %v1120 = vld [vmem:[%s11 + $0x20] sm:$0xff]
        %v1121 = vld [vmem:[%s11 + $0x28] sm:$0xff]
        %v1122 = vld [vmem:[%s11 + $0x30] sm:$0xff]
        %v1123 = vld [vmem:[%s11 + $0x38] sm:$0xff]
        %v1124 = vld [vmem:[%s11 + $0x40] sm:$0xff]
        %v1125 = vld [vmem:[%s11 + $0x48] sm:$0xff]
        %v1126 = vld [vmem:[%s11 + $0x50] sm:$0xff]
        %v1127 = vld [vmem:[%s11 + $0x58] sm:$0xff]
        %v1128 = vld [vmem:[%s11 + $0x60] sm:$0xff]
        %v1129 = vld [vmem:[%s11 + $0x68] sm:$0xff]
        %v1130 = vld [vmem:[%s11 + $0x70] sm:$0xff]
        %v1131 = vld [vmem:[%s11 + $0x78] sm:$0xff]
        %v1132 = vld [vmem:[%s12] sm:$0x1]
        %v1134 = vperm.slane %v1132, 0
        %1136 = vmatpush.msra.mxu0 %v1131
        %1137 = vmatpush.msra.mxu0 %v1130
        %1138 = vmatpush.msra.mxu0 %v1129
        %1139 = vmatpush.msra.mxu0 %v1128
        %1140 = vmatpush.msra.mxu0 %v1127
        %1141 = vmatpush.msra.mxu0 %v1126
        %1142 = vmatpush.msra.mxu0 %v1125
        %1143 = vmatpush.msra.mxu0 %v1124
        %1144 = vmatpush.msra.mxu0 %v1123
        %1145 = vmatpush.msra.mxu0 %v1122
        %1146 = vmatpush.msra.mxu0 %v1121
        %1147 = vmatpush.msra.mxu0 %v1120
        %1148 = vmatpush.msra.mxu0 %v1119
        %1149 = vmatpush.msra.mxu0 %v1118
        %1150 = vmatpush.msra.mxu0 %v1117
        %1151 = vmatpush.msra.mxu0 %v1116
        %1152 = vmatmul.f32.gmra.mxu0 %v1115
        %v1153 = vpop.f32.mrf.mxu0
        %v1154 = vadd.f32 %v1134, %v1153
        %1155 = vdwg.mxu0
        %v1156 = vadd.f32 %v1008, %v1154
        %1157 = vst.msk [vmem:[%s472] sm:$0xff] %vm476, %v1156
        %s1158 = sand.u32 %s317, 1
        %s1159 = scalar_lea.sflag [#allocation4], %s1158
        %s1160 = sand.u32 %s317, 1
        %s1161 = smul.addr %s1160, 8
        %s1162 = scalar_lea.vmem [#allocation7], %s1161
        // Predicated region
        $region81: #{tpu_custom_call.1} parent=71 // pred_check
          %p1163 = pneg %p327
        $region82: #{tpu_custom_call.1} parent=71 // pred_check_branch
          %1165 = sbr.rel (%p1163) target = $region84
        $region83: #{tpu_custom_call.1} parent=71 // pred_region
          %1167 = vsyncadd %s1159, 0
          %s1168 = smul.addr %s31, 8
          %s1169 = scalar_lea.hbm %s13, %s1168
          %s1171 = sshll.u32 %s1162, 4
          %s1172 = int_to_ptr.vmem [resolvable:$true] %s1171
          %s1173 = sshll.u32 %s1169, 4
          %s1174 = int_to_ptr.hbm [resolvable:$true] %s1173
          %1176 = dma.vmem_to_hbm [thread:$0]  %s1172, 128, %s1174, %s1159
        $region84: #{tpu_custom_call.1} parent=71 // pred_fallthru
          _
      $region72: #{tpu_custom_call.1} parent=5 // pred_fallthru
        _
      %p1177 = scmp.le.s32.totalorder 2, %s26
      // Predicated region
      $region85: #{tpu_custom_call.1} parent=5 // pred_check
        %p1178 = pneg %p1177
      $region86: #{tpu_custom_call.1} parent=5 // pred_check_branch
        %1180 = sbr.rel (%p1178) target = $region88
      $region87: #{tpu_custom_call.1} parent=5 // pred_region
        %s1181 = ssub.s32 %s26, 2
        // Predicated region
        $region89: #{tpu_custom_call.1} parent=87 // pred_check
          %p1182 = pneg %p333
        $region90: #{tpu_custom_call.1} parent=87 // pred_check_branch
          %1184 = sbr.rel (%p1182) target = $region92
        $region91: #{tpu_custom_call.1} parent=87 // pred_region
          %s1185 = sand.u32 %s318, 1
          %s1186 = scalar_lea.sflag [#allocation4], %s1185
          %s1187 = sand.u32 %s318, 1
          %s1188 = smul.addr %s1187, 8
          %s1189 = scalar_lea.vmem [#allocation7], %s1188
          %1191 = dma.done %s1186, 128
        $region92: #{tpu_custom_call.1} parent=87 // pred_fallthru
          _
      $region88: #{tpu_custom_call.1} parent=5 // pred_fallthru
        _
    $region6: #{tpu_custom_call.1} parent=1 // loop_footer
      %s30 = sadd.s32 1, %s26
    $region7: #{tpu_custom_call.1} parent=1 // loop_footer_branch
      %25 = sbr.rel target = $region3
    $region8: #{tpu_custom_call.1} parent=1 // loop_exit
      _
    %1192 = vsyncpa [#allocation3], 1
    %s1193 = scalar_lea.sflag [#allocation3], 1
    %1194 = vsyncpa %s1193, 1
    %1195 = vsyncpa [#allocation6], 1
    %1196 = vsyncpa [#allocation4], 1
    %s1197 = scalar_lea.sflag [#allocation4], 1
    %1198 = vsyncpa %s1197, 1

</llo_original>
